<compile_context>
chip_gen: v7x
topology: tpu7x:2x2x1
jax: 0.10.0
libtpu: 0.0.40
codegen_flags: <defaults>
</compile_context>

<pallas_src>
import math

import jax
import jax.numpy as jnp
from jax.experimental import pallas as pl
from jax.experimental.pallas import tpu as pltpu


def _round_up(x, m):
    return (x + m - 1) // m * m


def _pad2(a, rows, cols):
    r, c = a.shape
    if (r, c) == (rows, cols):
        return a
    return jnp.pad(a, ((0, rows - r), (0, cols - c)))


def _pick_tiles(n):
    """Return (tm, tk): row tile and adj-column (reduction) tile.

    tk >= tm and tm | tk, so padding N to a multiple of tk keeps both grid
    extents integral.  Larger graphs get larger tiles (per-grid-step overhead
    and accumulator traffic amortize with tk); small graphs keep 128 tiles so
    padding waste stays bounded.  All sizes stay far under VMEM limits on
    v5e/v6e (128 MiB) and v7x (64 MiB) with double buffering.
    """
    if n <= 512:
        return 128, 128
    if n <= 2048:
        return 256, 512
    return 512, 1024


def _layer1_kernel(rff_scale):
    """acc = adj @ g   (g = x @ W1 @ rand_proj, precomputed in the wrapper)
       p   = rff_scale * cos(acc + c)   (c = b1 @ rand_proj + phase, precomputed)."""

    def kernel(adj_ref, g_ref, c_ref, p_ref, acc_ref):
        k = pl.program_id(1)

        @pl.when(k == 0)
        def _():
            acc_ref[...] = jnp.zeros_like(acc_ref)

        # Propagation partial sum over adj-column tiles (bf16 in, f32 acc).
        acc_ref[...] += jnp.dot(adj_ref[...], g_ref[...],
                                preferred_element_type=jnp.float32)

        @pl.when(k == pl.num_programs(1) - 1)
        def _():
            p_ref[...] = (rff_scale * jnp.cos(acc_ref[...] + c_ref[...])
                          ).astype(p_ref.dtype)

    return kernel


def _layer2_kernel(nclass):
    """h2 = (adj @ p) @ W2 + b2 ; out = log_softmax over the first `nclass` lanes."""

    def kernel(adj_ref, p_ref, w2_ref, b2_ref, out_ref, acc_ref):
        k = pl.program_id(1)

        @pl.when(k == 0)
        def _():
            acc_ref[...] = jnp.zeros_like(acc_ref)

        acc_ref[...] += jnp.dot(adj_ref[...], p_ref[...],
                                preferred_element_type=jnp.float32)

        @pl.when(k == pl.num_programs(1) - 1)
        def _():
            h2 = jnp.dot(acc_ref[...].astype(jnp.bfloat16), w2_ref[...],
                         preferred_element_type=jnp.float32) + b2_ref[...]
            # Mask padded class lanes so they don't contribute to the lse.
            col = jax.lax.broadcasted_iota(jnp.int32, h2.shape, 1)
            h2 = jnp.where(col < nclass, h2, jnp.float32(-1e30))
            m = jnp.max(h2, axis=1, keepdims=True)
            z = h2 - m
            lse = jnp.log(jnp.sum(jnp.exp(z), axis=1, keepdims=True))
            out_ref[...] = (z - lse).astype(out_ref.dtype)

    return kernel


def gcn_forward(x, adj, w1, b1, rand_proj, phase_shift, w2, b2):
    """Full GCN forward in two tiled Pallas calls; returns (N, nclass) log-probs."""
    n = x.shape[0]
    nhid = w1.shape[1]
    nclass = w2.shape[1]
    rff_scale = math.sqrt(2.0 / nhid)

    f32, bf16 = jnp.float32, jnp.bfloat16
    hi = jax.lax.Precision.HIGHEST

    # Lane-dense padding of the hidden / class dims.
    nh_pad = _round_up(nhid, 128)
    nc_pad = _round_up(nclass, 128)

    # Pick tiles first, then pad N to them.
    tm, tk = _pick_tiles(n)
    n_pad = _round_up(n, tk)          # multiple of tm too (tm | tk)
    grid = (n_pad // tm, n_pad // tk)
    row_tiles = n_pad // tm

    # Node-independent small matmuls hoisted out of the kernels (f32, exact
    # reassociation of adj @ (x@W1) + b1 followed by @rand_proj + phase):
    #   g = x @ W1 @ rand_proj   (N, nhid)     c = b1 @ rand_proj + phase   (1, nhid)
    g = jnp.dot(jnp.dot(x.astype(f32), w1.astype(f32), precision=hi),
                rand_proj.astype(f32), precision=hi)
    c = jnp.dot(b1.astype(f32), rand_proj.astype(f32), precision=hi) \
        + phase_shift.astype(f32)

    # Pad to lane-dense shapes; MXU streams in bf16, accumulation stays f32.
    adj_p = _pad2(adj.astype(bf16), n_pad, n_pad)
    g_p = _pad2(g, n_pad, nh_pad).astype(bf16)
    c_p = _pad2(c, 1, nh_pad)                        # f32
    w2_p = _pad2(w2.astype(bf16), nh_pad, nc_pad)    # zero rows for padded nhid lanes
    b2_p = _pad2(b2.astype(f32), 1, nc_pad)

    # ---------------- layer 1 + RFF activation ----------------
    vmem1 = (2 * (tm * tk * 2 + tk * nh_pad * 2 + nh_pad * 4 + tm * nh_pad * 2)
             + tm * nh_pad * 4)
    cost1 = pl.CostEstimate(
        flops=2 * n_pad * n_pad * nh_pad,
        transcendentals=n_pad * nh_pad,
        bytes_accessed=(2 * n_pad * n_pad                      # adj, read once
                        + row_tiles * 2 * n_pad * nh_pad       # g re-read per row tile
                        + 2 * n_pad * nh_pad                   # p out
                        + 4 * nh_pad))                         # c

    p_act = pl.pallas_call(
        _layer1_kernel(rff_scale),
        out_shape=jax.ShapeDtypeStruct((n_pad, nh_pad), bf16),
        grid_spec=pltpu.PrefetchScalarGridSpec(
            num_scalar_prefetch=0,
            grid=grid,
            in_specs=[
                pl.BlockSpec((tm, tk), lambda i, k: (i, k)),       # adj tile
                pl.BlockSpec((tk, nh_pad), lambda i, k: (k, 0)),   # g tile
                pl.BlockSpec((1, nh_pad), lambda i, k: (0, 0)),    # c (resident)
            ],
            out_specs=pl.BlockSpec((tm, nh_pad), lambda i, k: (i, 0)),
            scratch_shapes=[pltpu.VMEM((tm, nh_pad), jnp.float32)],
        ),
        compiler_params=pltpu.CompilerParams(
            dimension_semantics=("parallel", "arbitrary"),
            vmem_limit_bytes=int(min(max(4 * vmem1, 4 << 20), 48 << 20))),
        cost_estimate=cost1,
    )(adj_p, g_p, c_p)

    # dropout: identity in eval mode (see TODO at top of file).

    # ---------------- layer 2 + log_softmax ----------------
    vmem2 = (2 * (tm * tk * 2 + tk * nh_pad * 2 + nh_pad * nc_pad * 2
                  + nc_pad * 4 + tm * nc_pad * 4) + tm * nh_pad * 4)
    cost2 = pl.CostEstimate(
        flops=2 * n_pad * n_pad * nh_pad + 2 * n_pad * nh_pad * nc_pad,
        transcendentals=n_pad * nc_pad,
        bytes_accessed=(2 * n_pad * n_pad                      # adj, read once
                        + row_tiles * 2 * n_pad * nh_pad       # p re-read per row tile
                        + 2 * nh_pad * nc_pad + 4 * nc_pad     # W2, b2
                        + 4 * n_pad * nc_pad))                 # out

    out = pl.pallas_call(
        _layer2_kernel(nclass),
        out_shape=jax.ShapeDtypeStruct((n_pad, nc_pad), jnp.float32),
        grid_spec=pltpu.PrefetchScalarGridSpec(
            num_scalar_prefetch=0,
            grid=grid,
            in_specs=[
                pl.BlockSpec((tm, tk), lambda i, k: (i, k)),          # adj tile
                pl.BlockSpec((tk, nh_pad), lambda i, k: (k, 0)),      # p tile
                pl.BlockSpec((nh_pad, nc_pad), lambda i, k: (0, 0)),  # W2 (resident)
                pl.BlockSpec((1, nc_pad), lambda i, k: (0, 0)),       # b2 (resident)
            ],
            out_specs=pl.BlockSpec((tm, nc_pad), lambda i, k: (i, 0)),
            scratch_shapes=[pltpu.VMEM((tm, nh_pad), jnp.float32)],
        ),
        compiler_params=pltpu.CompilerParams(
            dimension_semantics=("parallel", "arbitrary"),
            vmem_limit_bytes=int(min(max(4 * vmem2, 4 << 20), 48 << 20))),
        cost_estimate=cost2,
    )(adj_p, p_act, w2_p, b2_p)

    # Strip row padding and the padded class lanes.
    return out[:n, :nclass]


def gcn_reference(x, adj, w1, b1, rand_proj, phase_shift, w2, b2):
    """Pure-JAX f32 reference mirroring the PyTorch forward (eval mode)."""
    nhid = w1.shape[1]
    h1 = adj @ (x @ w1) + b1
    p = math.sqrt(2.0 / nhid) * jnp.cos(h1 @ rand_proj + phase_shift)
    h2 = adj @ (p @ w2) + b2
    return jax.nn.log_softmax(h2, axis=1)


if __name__ == "__main__":
    # Small, deterministic problem sizes.  N=512 exercises the multi-tile
    # accumulation + parallel row axis; NHID=32 exercises the nhid->128 padding.
    N, NFEAT, NHID, NCLASS = 512, 64, 32, 7

    key = jax.random.PRNGKey(0)
    keys = jax.random.split(key, 8)

    # Node features and a row-normalized dense adjacency (with self-loops).
    x = jax.random.normal(keys[0], (N, NFEAT), dtype=jnp.float32)
    a = (jax.random.uniform(keys[1], (N, N)) < 0.05).astype(jnp.float32)
    a = jnp.maximum(a, a.T) + jnp.eye(N, dtype=jnp.float32)
    adj = a / jnp.sum(a, axis=1, keepdims=True)

    # GraphConvolution params: uniform(-1/sqrt(out), 1/sqrt(out)) like pygcn.
    stdv1 = 1.0 / math.sqrt(NHID)
    w1 = jax.random.uniform(keys[2], (NFEAT, NHID), jnp.float32, -stdv1, stdv1)
    b1 = jax.random.uniform(keys[3], (1, NHID), jnp.float32, -stdv1, stdv1)

    stdv2 = 1.0 / math.sqrt(NCLASS)
    w2 = jax.random.uniform(keys[4], (NHID, NCLASS), jnp.float32, -stdv2, stdv2)
    b2 = jax.random.uniform(keys[5], (1, NCLASS), jnp.float32, -stdv2, stdv2)

    # rff params: phase_shift = 2*pi*rand(1, nhid); rand_proj = randn(nhid, nhid)/sigma.
    sigma = 1.0
    phase_shift = 2.0 * math.pi * jax.random.uniform(keys[6], (1, NHID),
                                                     jnp.float32)
    rand_proj = jax.random.normal(keys[7], (NHID, NHID), jnp.float32) / sigma

    out = gcn_forward(x, adj, w1, b1, rand_proj, phase_shift, w2, b2)
    out = jax.block_until_ready(out)

    ref = gcn_reference(x, adj, w1, b1, rand_proj, phase_shift, w2, b2)
    assert out.shape == (N, NCLASS)
    # bf16 MXU inputs (f32 accumulation) -> loosened tolerance vs f32 reference.
    assert jnp.allclose(out, ref, atol=5e-2, rtol=5e-2), "mismatch vs reference"

    print("KERNEL_OK")
</pallas_src>

<mosaic_0001>
module attributes {stable_mosaic.version = 11 : i64} {
  func.func @kernel(%arg0: i32, %arg1: i32, %arg2: memref<128x128xbf16, #tpu.memory_space<vmem>>, %arg3: memref<128x128xbf16, #tpu.memory_space<vmem>>, %arg4: memref<1x128xf32, #tpu.memory_space<vmem>>, %arg5: memref<128x128xbf16, #tpu.memory_space<vmem>>, %arg6: memref<128x128xf32, #tpu.memory_space<vmem>>) attributes {dimension_semantics = [#tpu.dimension_semantics<parallel>, #tpu.dimension_semantics<arbitrary>], iteration_bounds = array<i64: 4, 4>, scalar_prefetch = 0 : i64, scratch_operands = 1 : i64, tpu.core_type = #tpu.core_type<tc>, window_params = [{transform_indices = @transform_0, window_bounds = array<i64: 128, 128>}, {transform_indices = @transform_1, window_bounds = array<i64: 128, 128>}, {pipeline_mode = #tpu.pipeline_mode<synchronous>, transform_indices = @transform_2, window_bounds = array<i64: 1, 128>}, {transform_indices = @transform_3, window_bounds = array<i64: 128, 128>}]} {
    %c0_i32 = arith.constant 0 : i32
    %0 = arith.cmpi eq, %arg1, %c0_i32 : i32
    %1 = arith.extui %0 : i1 to i32
    %c0_i32_0 = arith.constant 0 : i32
    %2 = arith.cmpi ne, %1, %c0_i32_0 : i32
    scf.if %2 {
      %cst_9 = arith.constant 0.000000e+00 : f32
      %12 = vector.broadcast %cst_9 : f32 to vector<128x128xf32>
      %c0_10 = arith.constant 0 : index
      %c0_11 = arith.constant 0 : index
      %13 = vector.load %arg6[%c0_10, %c0_11] : memref<128x128xf32, #tpu.memory_space<vmem>>, vector<128x128xf32>
      tpu.vector_store %arg6[%c0_10, %c0_11], %12 {strides = array<i32>} : memref<128x128xf32, #tpu.memory_space<vmem>>, vector<128x128xf32>,
    } else {
    }
    %c0 = arith.constant 0 : index
    %c0_1 = arith.constant 0 : index
    %3 = vector.load %arg6[%c0, %c0_1] : memref<128x128xf32, #tpu.memory_space<vmem>>, vector<128x128xf32>
    %c0_2 = arith.constant 0 : index
    %c0_3 = arith.constant 0 : index
    %4 = vector.load %arg2[%c0_2, %c0_3] : memref<128x128xbf16, #tpu.memory_space<vmem>>, vector<128x128xbf16>
    %c0_4 = arith.constant 0 : index
    %c0_5 = arith.constant 0 : index
    %5 = vector.load %arg3[%c0_4, %c0_5] : memref<128x128xbf16, #tpu.memory_space<vmem>>, vector<128x128xbf16>
    %cst = arith.constant dense<0.000000e+00> : vector<128x128xf32>
    %6 = tpu.matmul %4, %5, %cst {dimension_numbers = #tpu.dot_dimension_numbers<[1], [0], [0], [1], [0, 0, 1, 1], [], []>} : vector<128x128xbf16>, vector<128x128xbf16>, vector<128x128xf32> -> vector<128x128xf32>
    %7 = arith.addf %3, %6 : vector<128x128xf32>
    %c0_6 = arith.constant 0 : index
    %c0_7 = arith.constant 0 : index
    %8 = vector.load %arg6[%c0_6, %c0_7] : memref<128x128xf32, #tpu.memory_space<vmem>>, vector<128x128xf32>
    tpu.vector_store %arg6[%c0_6, %c0_7], %7 {strides = array<i32>} : memref<128x128xf32, #tpu.memory_space<vmem>>, vector<128x128xf32>,
    %c3_i32 = arith.constant 3 : i32
    %9 = arith.cmpi eq, %arg1, %c3_i32 : i32
    %10 = arith.extui %9 : i1 to i32
    %c0_i32_8 = arith.constant 0 : i32
    %11 = arith.cmpi ne, %10, %c0_i32_8 : i32
    scf.if %11 {
      %c0_9 = arith.constant 0 : index
      %c0_10 = arith.constant 0 : index
      %12 = vector.load %arg6[%c0_9, %c0_10] : memref<128x128xf32, #tpu.memory_space<vmem>>, vector<128x128xf32>
      %c0_11 = arith.constant 0 : index
      %c0_12 = arith.constant 0 : index
      %13 = vector.load %arg4[%c0_11, %c0_12] : memref<1x128xf32, #tpu.memory_space<vmem>>, vector<1x128xf32>
      %14 = vector.broadcast %13 : vector<1x128xf32> to vector<128x128xf32>
      %15 = arith.addf %12, %14 : vector<128x128xf32>
      %16 = math.cos %15 : vector<128x128xf32>
      %cst_13 = arith.constant 2.500000e-01 : f32
      %17 = vector.broadcast %cst_13 : f32 to vector<128x128xf32>
      %18 = arith.mulf %17, %16 : vector<128x128xf32>
      %19 = arith.truncf %18 : vector<128x128xf32> to vector<128x128xbf16>
      %c0_14 = arith.constant 0 : index
      %c0_15 = arith.constant 0 : index
      %20 = vector.load %arg5[%c0_14, %c0_15] : memref<128x128xbf16, #tpu.memory_space<vmem>>, vector<128x128xbf16>
      tpu.vector_store %arg5[%c0_14, %c0_15], %19 {strides = array<i32>} : memref<128x128xbf16, #tpu.memory_space<vmem>>, vector<128x128xbf16>,
    } else {
    }
    return
  }
  func.func @transform_0(%arg0: i32, %arg1: i32) -> (i32, i32) {
    %c0_i32 = arith.constant 0 : i32
    return %arg0, %arg1 : i32, i32
  }
  func.func @transform_1(%arg0: i32, %arg1: i32) -> (i32, i32) {
    %c0_i32 = arith.constant 0 : i32
    %c0_i32_0 = arith.constant 0 : i32
    return %arg1, %c0_i32 : i32, i32
  }
  func.func @transform_2(%arg0: i32, %arg1: i32) -> (i32, i32) {
    %c0_i32 = arith.constant 0 : i32
    %c0_i32_0 = arith.constant 0 : i32
    %c0_i32_1 = arith.constant 0 : i32
    return %c0_i32, %c0_i32_0 : i32, i32
  }
  func.func @transform_3(%arg0: i32, %arg1: i32) -> (i32, i32) {
    %c0_i32 = arith.constant 0 : i32
    %c0_i32_0 = arith.constant 0 : i32
    return %arg0, %c0_i32 : i32, i32
  }
}

</mosaic_0001>

<llo_original>
// kernel: tpu_custom_call.1
$region0: #{tpu_custom_call.1}
  #allocation0 [shape = 'u32[]', space=smem, size = 0x4, offset = 0x4, fixed_abs, tag = 'smem constant byte address 0x4 - core index']
  #allocation1 [shape = 'u32[144,128]{1,0:T(1,128)}', space=vmem, size = 0x12000, scoped, tag = 'internal scratch']
  #allocation2 [shape = 'f32[128,128]{1,0:T(8,128)}', space=vmem, size = 0x10000, scoped, tag = 'scratch operand']
  %s0 = inlined_call_operand.hbm [shape: bf16[512,512], index: 0, kind: input, shape index: {}]
  %s1 = inlined_call_operand.hbm [shape: bf16[512,128], index: 1, kind: input, shape index: {}]
  %s2 = inlined_call_operand.vmem [shape: f32[1,128], index: 2, kind: input, shape index: {}]
  %s3 = inlined_call_operand.hbm [shape: bf16[512,128], index: 3, kind: output, shape index: {}]
  %s4 = sld [smem:[#allocation0]]
  $region61: #{tpu_custom_call.1} parent=0
    _
  %s6 = ssub.s32 1, %s4
  %s7 = scalar_select 0, %s6, %s4
  $region1: #{tpu_custom_call.1} parent=0
    #allocation3 [shape = 'u8[65536]{0}', space=vmem, size = 0x10000, scoped, tag = 'input window, operand 0']
    #allocation4 [shape = 's32[2]{0}', space=sflag, size = 0x8, scoped, tag = 'scoped memory for tpu_custom_call.1']
    #allocation5 [shape = 's32[2]{0}', space=sflag, size = 0x8, scoped, tag = 'scoped memory for tpu_custom_call.1']
    #allocation6 [shape = 'u8[65536]{0}', space=vmem, size = 0x10000, scoped, tag = 'input window, operand 1']
    #allocation7 [shape = 's32[2]{0}', space=sflag, size = 0x8, scoped, tag = 'scoped memory for tpu_custom_call.1']
    #allocation8 [shape = 'u8[65536]{0}', space=vmem, size = 0x10000, scoped, tag = 'output window, operand 0']
    %8 = vsyncpa [#allocation4], 0
    %s9 = scalar_lea.sflag [#allocation4], 1
    %10 = vsyncpa %s9, 0
    %11 = vsyncpa [#allocation7], 0
    %s12 = scalar_lea.sflag [#allocation7], 1
    %13 = vsyncpa %s12, 0
    %14 = vsyncpa [#allocation5], 0
    %s15 = scalar_lea.sflag [#allocation5], 1
    %16 = vsyncpa %s15, 0
    loop: start=0, step=1, limit=18
    $region2: #{tpu_custom_call.1} parent=1 // loop_pre_header
      _
    $region3: #{tpu_custom_call.1} parent=1 // loop_header
      %s18 = sphi 0, %s22
      %p19 = scmp.ge.s32.totalorder %s18, 18
      %s25 = sphi 0, %s37
      %s26 = sphi 0, %s33
      %s27 = sphi 0, %s25
      %s28 = sphi 0, %s26
      %s29 = sphi 0, %s27
      %s30 = sphi 0, %s28
      %s42 = sphi 0, %s44
      %s45 = sphi 0, %s42
      %s46 = sphi 0, %s45
      %s62 = sphi 0, %s46
      %s68 = sphi 0, %s70
      %s71 = sphi 0, %s68
      %s72 = sphi 0, %s71
      %s88 = sphi 0, %s72
      %s92 = sphi 0, %s92
      %s94 = sphi 0, %s92
      %s95 = sphi 0, %s94
      %s109 = sphi 0, %s95
      %s115 = sphi 0, %s117
      %s118 = sphi 0, %s115
      %s119 = sphi 0, %s118
      %s135 = sphi 0, %s119
    $region4: #{tpu_custom_call.1} parent=1 // loop_header_branch
      %21 = sbr.rel (%p19) target = $region8
    $region5: #{tpu_custom_call.1} parent=1 // loop_body
      %s23 = ssub.s32 %s18, 1
      %s24 = ssub.s32 %s18, 2
      %s31 = sadd.s32 1, %s26
      %p32 = scmp.ge.s32.totalorder %s31, 4
      %s33 = scalar_select %p32, 0, %s31
      %s34 = sadd.s32 1, %s25
      %s35 = scalar_select %p32, %s34, %s25
      %p36 = scmp.ge.s32.totalorder %s35, 4
      %s37 = scalar_select %p36, 0, %s35
      %s38 = ssub.s32 %s25, %s37
      %s39 = ssub.s32 %s26, %s33
      %s40 = sor.u32 %s38, %s39
      %p41 = scmp.eq.s32.totalorder %s40, 0
      %s43 = sadd.s32 %s42, 1
      %s44 = scalar_select %p41, %s42, %s43
      %p47 = pneg %p41
      %p48 = scmp.eq.s32.totalorder %s18, 15
      %p49 = por %p47, %p48
      %p50 = scmp.ne.s32.totalorder %s42, %s45
      %p51 = scmp.eq.s32.totalorder %s18, 0
      %p52 = por %p50, %p51
      %p53 = scmp.ne.s32.totalorder %s42, %s45
      %p54 = scmp.eq.s32.totalorder %s23, 15
      %p55 = por %p53, %p54
      %p56 = scmp.ne.s32.totalorder %s45, %s46
      %p57 = scmp.eq.s32.totalorder %s23, 0
      %p58 = por %p56, %p57
      %p59 = scmp.ne.s32.totalorder %s45, %s46
      %p60 = scmp.eq.s32.totalorder %s24, 15
      %p61 = por %p59, %p60
      %p63 = scmp.ne.s32.totalorder %s46, %s62
      %p64 = scmp.eq.s32.totalorder %s24, 0
      %p65 = por %p63, %p64
      %s66 = ssub.s32 %s26, %s33
      %p67 = scmp.eq.s32.totalorder %s66, 0
      %s69 = sadd.s32 %s68, 1
      %s70 = scalar_select %p67, %s68, %s69
      %p73 = pneg %p67
      %p74 = scmp.eq.s32.totalorder %s18, 15
      %p75 = por %p73, %p74
      %p76 = scmp.ne.s32.totalorder %s68, %s71
      %p77 = scmp.eq.s32.totalorder %s18, 0
      %p78 = por %p76, %p77
      %p79 = scmp.ne.s32.totalorder %s68, %s71
      %p80 = scmp.eq.s32.totalorder %s23, 15
      %p81 = por %p79, %p80
      %p82 = scmp.ne.s32.totalorder %s71, %s72
      %p83 = scmp.eq.s32.totalorder %s23, 0
      %p84 = por %p82, %p83
      %p85 = scmp.ne.s32.totalorder %s71, %s72
      %p86 = scmp.eq.s32.totalorder %s24, 15
      %p87 = por %p85, %p86
      %p89 = scmp.ne.s32.totalorder %s72, %s88
      %p90 = scmp.eq.s32.totalorder %s24, 0
      %p91 = por %p89, %p90
      %s93 = sadd.s32 %s92, 1
      %p96 = scmp.eq.s32.totalorder %s18, 15
      %p97 = scmp.ne.s32.totalorder %s92, %s94
      %p98 = scmp.eq.s32.totalorder %s18, 0
      %p99 = por %p97, %p98
      %p100 = scmp.ne.s32.totalorder %s92, %s94
      %p101 = scmp.eq.s32.totalorder %s23, 15
      %p102 = por %p100, %p101
      %p103 = scmp.ne.s32.totalorder %s94, %s95
      %p104 = scmp.eq.s32.totalorder %s23, 0
      %p105 = por %p103, %p104
      %p106 = scmp.ne.s32.totalorder %s94, %s95
      %p107 = scmp.eq.s32.totalorder %s24, 15
      %p108 = por %p106, %p107
      %p110 = scmp.ne.s32.totalorder %s95, %s109
      %p111 = scmp.eq.s32.totalorder %s24, 0
      %p112 = por %p110, %p111
      %s113 = ssub.s32 %s25, %s37
      %p114 = scmp.eq.s32.totalorder %s113, 0
      %s116 = sadd.s32 %s115, 1
      %s117 = scalar_select %p114, %s115, %s116
      %p120 = pneg %p114
      %p121 = scmp.eq.s32.totalorder %s18, 15
      %p122 = por %p120, %p121
      %p123 = scmp.ne.s32.totalorder %s115, %s118
      %p124 = scmp.eq.s32.totalorder %s18, 0
      %p125 = por %p123, %p124
      %p126 = scmp.ne.s32.totalorder %s115, %s118
      %p127 = scmp.eq.s32.totalorder %s23, 15
      %p128 = por %p126, %p127
      %p129 = scmp.ne.s32.totalorder %s118, %s119
      %p130 = scmp.eq.s32.totalorder %s23, 0
      %p131 = por %p129, %p130
      %p132 = scmp.ne.s32.totalorder %s118, %s119
      %p133 = scmp.eq.s32.totalorder %s24, 15
      %p134 = por %p132, %p133
      %p136 = scmp.ne.s32.totalorder %s119, %s135
      %p137 = scmp.eq.s32.totalorder %s24, 0
      %p138 = por %p136, %p137
      %p139 = scmp.le.s32.totalorder 1, %s18
      %p140 = scmp.lt.s32.totalorder %s18, 17
      %p141 = pnand %p139, %p140
      %p142 = pneg %p141
      // Predicated region
      $region9: #{tpu_custom_call.1} parent=5 // pred_check
        _
      $region10: #{tpu_custom_call.1} parent=5 // pred_check_branch
        %144 = sbr.rel (%p141) target = $region12
      $region11: #{tpu_custom_call.1} parent=5 // pred_region
        %s145 = ssub.s32 %s18, 1
        // Predicated region
        $region13: #{tpu_custom_call.1} parent=11 // pred_check
          %p146 = pneg %p105
        $region14: #{tpu_custom_call.1} parent=11 // pred_check_branch
          %148 = sbr.rel (%p146) target = $region16
        $region15: #{tpu_custom_call.1} parent=11 // pred_region
          _
        $region16: #{tpu_custom_call.1} parent=11 // pred_fallthru
          _
      $region12: #{tpu_custom_call.1} parent=5 // pred_fallthru
        _
      %p149 = scmp.lt.s32.totalorder %s18, 16
      // Predicated region
      $region17: #{tpu_custom_call.1} parent=5 // pred_check
        %p150 = pneg %p149
      $region18: #{tpu_custom_call.1} parent=5 // pred_check_branch
        %152 = sbr.rel (%p150) target = $region20
      $region19: #{tpu_custom_call.1} parent=5 // pred_region
        // Predicated region
        $region21: #{tpu_custom_call.1} parent=19 // pred_check
          %p153 = pneg %p52
        $region22: #{tpu_custom_call.1} parent=19 // pred_check_branch
          %155 = sbr.rel (%p153) target = $region24
        $region23: #{tpu_custom_call.1} parent=19 // pred_region
          %s156 = sand.u32 %s42, 1
          %s157 = scalar_lea.sflag [#allocation4], %s156
          %s158 = sand.u32 %s42, 1
          %s159 = smul.addr %s158, 64
          %s160 = scalar_lea.vmem [#allocation3], %s159
          %s161 = smul.u32 16, %s25
          %s163 = ssub.s32 1024, 1024
          %164 = vsyncadd %s157, %s163
          %s165 = smul.addr %s161, 4
          %s166 = sadd.s32 %s26, %s165
          %s167 = smul.addr %s166, 64
          %s168 = scalar_lea.hbm %s0, %s167
          %s169 = sshll.u32 %s160, 4
          %s170 = int_to_ptr.vmem [resolvable:$true] %s169
          %175 = dma.hbm_to_vmem [thread:$0]  %s168, 1024, %s170, %s157, 256, 64, 4
        $region24: #{tpu_custom_call.1} parent=19 // pred_fallthru
          _
        // Predicated region
        $region25: #{tpu_custom_call.1} parent=19 // pred_check
          %p176 = pneg %p78
        $region26: #{tpu_custom_call.1} parent=19 // pred_check_branch
          %178 = sbr.rel (%p176) target = $region28
        $region27: #{tpu_custom_call.1} parent=19 // pred_region
          %s179 = sand.u32 %s68, 1
          %s180 = scalar_lea.sflag [#allocation7], %s179
          %s181 = sand.u32 %s68, 1
          %s182 = smul.addr %s181, 64
          %s183 = scalar_lea.vmem [#allocation6], %s182
          %s184 = smul.u32 16, %s26
          %s186 = ssub.s32 1024, 1024
          %187 = vsyncadd %s180, %s186
          %s188 = smul.addr %s184, 64
          %s189 = scalar_lea.hbm %s1, %s188
          %s190 = sshll.u32 %s183, 4
          %s191 = int_to_ptr.vmem [resolvable:$true] %s190
          %196 = dma.hbm_to_vmem [thread:$0]  %s189, 1024, %s191, %s180, 64, 64, 4
        $region28: #{tpu_custom_call.1} parent=19 // pred_fallthru
          _
      $region20: #{tpu_custom_call.1} parent=5 // pred_fallthru
        _
      %p197 = scmp.le.s32.totalorder 1, %s18
      %p198 = scmp.lt.s32.totalorder %s18, 17
      %p199 = pnand %p197, %p198
      %p200 = pneg %p199
      // Predicated region
      $region29: #{tpu_custom_call.1} parent=5 // pred_check
        _
      $region30: #{tpu_custom_call.1} parent=5 // pred_check_branch
        %202 = sbr.rel (%p199) target = $region32
      $region31: #{tpu_custom_call.1} parent=5 // pred_region
        %s203 = ssub.s32 %s18, 1
        %s204 = sand.u32 %s45, 1
        %s205 = scalar_lea.sflag [#allocation4], %s204
        %s206 = sand.u32 %s45, 1
        %s207 = smul.addr %s206, 64
        %s208 = scalar_lea.vmem [#allocation3], %s207
        // Predicated region
        $region33: #{tpu_custom_call.1} parent=31 // pred_check
          %p209 = pneg %p58
        $region34: #{tpu_custom_call.1} parent=31 // pred_check_branch
          %211 = sbr.rel (%p209) target = $region36
        $region35: #{tpu_custom_call.1} parent=31 // pred_region
          %212 = dma.done %s205, 1024
        $region36: #{tpu_custom_call.1} parent=31 // pred_fallthru
          _
        %s213 = sand.u32 %s71, 1
        %s214 = scalar_lea.sflag [#allocation7], %s213
        %s215 = sand.u32 %s71, 1
        %s216 = smul.addr %s215, 64
        %s217 = scalar_lea.vmem [#allocation6], %s216
        // Predicated region
        $region37: #{tpu_custom_call.1} parent=31 // pred_check
          %p218 = pneg %p84
        $region38: #{tpu_custom_call.1} parent=31 // pred_check_branch
          %220 = sbr.rel (%p218) target = $region40
        $region39: #{tpu_custom_call.1} parent=31 // pred_region
          %221 = dma.done %s214, 1024
        $region40: #{tpu_custom_call.1} parent=31 // pred_fallthru
          _
        %s222 = sand.u32 %s45, 1
        %s223 = scalar_lea.sflag [#allocation4], %s222
        %s224 = sand.u32 %s45, 1
        %s225 = smul.addr %s224, 64
        %s226 = scalar_lea.vmem [#allocation3], %s225
        %p227 = pneg %p58
        %p228 = pneg %p55
        %s229 = sand.u32 %s71, 1
        %s230 = scalar_lea.sflag [#allocation7], %s229
        %s231 = sand.u32 %s71, 1
        %s232 = smul.addr %s231, 64
        %s233 = scalar_lea.vmem [#allocation6], %s232
        %p234 = pneg %p84
        %p235 = pneg %p81
        %p236 = pneg %p105
        %p237 = pneg %p102
        %p238 = pneg %p131
        %p239 = pneg %p128
        %s240 = sand.u32 %s118, 1
        %s241 = scalar_lea.sflag [#allocation5], %s240
        %s242 = sand.u32 %s118, 1
        %s243 = smul.addr %s242, 64
        %s244 = scalar_lea.vmem [#allocation8], %s243
        %s245 = smul.u32 16, %s27
        %s246 = smul.u32 16, %s28
        %s247 = smul.u32 16, %s27
        %p249 = scmp.eq.s32.totalorder %s28, 0
        // Predicated region
        $region41: #{tpu_custom_call.1} parent=31 // pred_check
          %p250 = pneg %p249
        $region42: #{tpu_custom_call.1} parent=31 // pred_check_branch
          %252 = sbr.rel (%p250) target = $region44
        $region43: #{tpu_custom_call.1} parent=31 // pred_region
          %253 = vst [vmem:[#allocation2] sm:$0xff] 0.0
          %254 = vst [vmem:[#allocation2 + $0x8] sm:$0xff] 0.0
          %255 = vst [vmem:[#allocation2 + $0x10] sm:$0xff] 0.0
          %256 = vst [vmem:[#allocation2 + $0x18] sm:$0xff] 0.0
          %257 = vst [vmem:[#allocation2 + $0x20] sm:$0xff] 0.0
          %258 = vst [vmem:[#allocation2 + $0x28] sm:$0xff] 0.0
          %259 = vst [vmem:[#allocation2 + $0x30] sm:$0xff] 0.0
          %260 = vst [vmem:[#allocation2 + $0x38] sm:$0xff] 0.0
          %261 = vst [vmem:[#allocation2 + $0x40] sm:$0xff] 0.0
          %262 = vst [vmem:[#allocation2 + $0x48] sm:$0xff] 0.0
          %263 = vst [vmem:[#allocation2 + $0x50] sm:$0xff] 0.0
          %264 = vst [vmem:[#allocation2 + $0x58] sm:$0xff] 0.0
          %265 = vst [vmem:[#allocation2 + $0x60] sm:$0xff] 0.0
          %266 = vst [vmem:[#allocation2 + $0x68] sm:$0xff] 0.0
          %267 = vst [vmem:[#allocation2 + $0x70] sm:$0xff] 0.0
          %268 = vst [vmem:[#allocation2 + $0x78] sm:$0xff] 0.0
        $region44: #{tpu_custom_call.1} parent=31 // pred_fallthru
          _
        %v269 = vld [vmem:[#allocation2] sm:$0xff]
        %v270 = vld [vmem:[#allocation2 + $0x8] sm:$0xff]
        %v271 = vld [vmem:[#allocation2 + $0x10] sm:$0xff]
        %v272 = vld [vmem:[#allocation2 + $0x18] sm:$0xff]
        %v273 = vld [vmem:[#allocation2 + $0x20] sm:$0xff]
        %v274 = vld [vmem:[#allocation2 + $0x28] sm:$0xff]
        %v275 = vld [vmem:[#allocation2 + $0x30] sm:$0xff]
        %v276 = vld [vmem:[#allocation2 + $0x38] sm:$0xff]
        %v277 = vld [vmem:[#allocation2 + $0x40] sm:$0xff]
        %v278 = vld [vmem:[#allocation2 + $0x48] sm:$0xff]
        %v279 = vld [vmem:[#allocation2 + $0x50] sm:$0xff]
        %v280 = vld [vmem:[#allocation2 + $0x58] sm:$0xff]
        %v281 = vld [vmem:[#allocation2 + $0x60] sm:$0xff]
        %v282 = vld [vmem:[#allocation2 + $0x68] sm:$0xff]
        %v283 = vld [vmem:[#allocation2 + $0x70] sm:$0xff]
        %v284 = vld [vmem:[#allocation2 + $0x78] sm:$0xff]
        %v285 = vld [vmem:[%s208] sm:$0xf]
        %v286 = vld [vmem:[%s208 + $0x4] sm:$0xf]
        %v287 = vld [vmem:[%s208 + $0x8] sm:$0xf]
        %v288 = vld [vmem:[%s208 + $0xc] sm:$0xf]
        %v289 = vld [vmem:[%s208 + $0x10] sm:$0xf]
        %v290 = vld [vmem:[%s208 + $0x14] sm:$0xf]
        %v291 = vld [vmem:[%s208 + $0x18] sm:$0xf]
        %v292 = vld [vmem:[%s208 + $0x1c] sm:$0xf]
        %v293 = vld [vmem:[%s208 + $0x20] sm:$0xf]
        %v294 = vld [vmem:[%s208 + $0x24] sm:$0xf]
        %v295 = vld [vmem:[%s208 + $0x28] sm:$0xf]
        %v296 = vld [vmem:[%s208 + $0x2c] sm:$0xf]
        %v297 = vld [vmem:[%s208 + $0x30] sm:$0xf]
        %v298 = vld [vmem:[%s208 + $0x34] sm:$0xf]
        %v299 = vld [vmem:[%s208 + $0x38] sm:$0xf]
        %v300 = vld [vmem:[%s208 + $0x3c] sm:$0xf]
        %v301 = vld [vmem:[%s217] sm:$0xf]
        %v302 = vld [vmem:[%s217 + $0x4] sm:$0xf]
        %v303 = vld [vmem:[%s217 + $0x8] sm:$0xf]
        %v304 = vld [vmem:[%s217 + $0xc] sm:$0xf]
        %v305 = vld [vmem:[%s217 + $0x10] sm:$0xf]
        %v306 = vld [vmem:[%s217 + $0x14] sm:$0xf]
        %v307 = vld [vmem:[%s217 + $0x18] sm:$0xf]
        %v308 = vld [vmem:[%s217 + $0x1c] sm:$0xf]
        %v309 = vld [vmem:[%s217 + $0x20] sm:$0xf]
        %v310 = vld [vmem:[%s217 + $0x24] sm:$0xf]
        %v311 = vld [vmem:[%s217 + $0x28] sm:$0xf]
        %v312 = vld [vmem:[%s217 + $0x2c] sm:$0xf]
        %v313 = vld [vmem:[%s217 + $0x30] sm:$0xf]
        %v314 = vld [vmem:[%s217 + $0x34] sm:$0xf]
        %v315 = vld [vmem:[%s217 + $0x38] sm:$0xf]
        %v316 = vld [vmem:[%s217 + $0x3c] sm:$0xf]
        %v333 = vunpack.c.l.b16 %v285
        %v334 = vunpack.c.l.b16 %v286
        %v335 = vunpack.c.l.b16 %v287
        %v336 = vunpack.c.l.b16 %v288
        %v337 = vunpack.c.l.b16 %v289
        %v338 = vunpack.c.l.b16 %v290
        %v339 = vunpack.c.l.b16 %v291
        %v340 = vunpack.c.l.b16 %v292
        %v341 = vunpack.c.l.b16 %v293
        %v342 = vunpack.c.l.b16 %v294
        %v343 = vunpack.c.l.b16 %v295
        %v344 = vunpack.c.l.b16 %v296
        %v345 = vunpack.c.l.b16 %v297
        %v346 = vunpack.c.l.b16 %v298
        %v347 = vunpack.c.l.b16 %v299
        %v348 = vunpack.c.l.b16 %v300
        %v349 = vpack.c.b16 %v334, %v333
        %v350 = vpack.c.b16 %v336, %v335
        %v351 = vpack.c.b16 %v338, %v337
        %v352 = vpack.c.b16 %v340, %v339
        %v353 = vpack.c.b16 %v342, %v341
        %v354 = vpack.c.b16 %v344, %v343
        %v355 = vpack.c.b16 %v346, %v345
        %v356 = vpack.c.b16 %v348, %v347
        %v381 = vunpack.c.l.b16 %v301
        %v382 = vunpack.c.l.b16 %v302
        %v383 = vunpack.c.l.b16 %v303
        %v384 = vunpack.c.l.b16 %v304
        %v385 = vunpack.c.l.b16 %v305
        %v386 = vunpack.c.l.b16 %v306
        %v387 = vunpack.c.l.b16 %v307
        %v388 = vunpack.c.l.b16 %v308
        %v389 = vunpack.c.l.b16 %v309
        %v390 = vunpack.c.l.b16 %v310
        %v391 = vunpack.c.l.b16 %v311
        %v392 = vunpack.c.l.b16 %v312
        %v393 = vunpack.c.l.b16 %v313
        %v394 = vunpack.c.l.b16 %v314
        %v395 = vunpack.c.l.b16 %v315
        %v396 = vunpack.c.l.b16 %v316
        %v397 = vpack.c.b16 %v382, %v381
        %v398 = vpack.c.b16 %v384, %v383
        %v399 = vpack.c.b16 %v386, %v385
        %v400 = vpack.c.b16 %v388, %v387
        %v401 = vpack.c.b16 %v390, %v389
        %v402 = vpack.c.b16 %v392, %v391
        %v403 = vpack.c.b16 %v394, %v393
        %v404 = vpack.c.b16 %v396, %v395
        %413 = vmatprep.subr.bf16.mxu0 0
        %414 = vmatpush1.bf16.msra.mxu0 %v397
        %415 = vmatprep.subr.bf16.mxu0 0
        %416 = vmatpush1.bf16.msra.mxu0 %v398
        %417 = vmatprep.subr.bf16.mxu0 0
        %418 = vmatpush1.bf16.msra.mxu0 %v399
        %419 = vmatprep.subr.bf16.mxu0 0
        %420 = vmatpush1.bf16.msra.mxu0 %v400
        %421 = vmatprep.subr.bf16.mxu0 0
        %422 = vmatpush1.bf16.msra.mxu0 %v401
        %423 = vmatprep.subr.bf16.mxu0 0
        %424 = vmatpush1.bf16.msra.mxu0 %v402
        %425 = vmatprep.subr.bf16.mxu0 0
        %426 = vmatpush1.bf16.msra.mxu0 %v403
        %427 = vmatprep.subr.bf16.mxu0 0
        %428 = vmatpush1.bf16.msra.mxu0 %v404
        %429 = vmatprep.subr.bf16.mxu0 0
        %430 = vmatpush1.bf16.msra.mxu0 0
        %431 = vmatprep.subr.bf16.mxu0 0
        %432 = vmatpush1.bf16.msra.mxu0 0
        %433 = vmatprep.subr.bf16.mxu0 0
        %434 = vmatpush1.bf16.msra.mxu0 0
        %435 = vmatprep.subr.bf16.mxu0 0
        %436 = vmatpush1.bf16.msra.mxu0 0
        %437 = vmatprep.subr.bf16.mxu0 0
        %438 = vmatpush1.bf16.msra.mxu0 0
        %439 = vmatprep.subr.bf16.mxu0 0
        %440 = vmatpush1.bf16.msra.mxu0 0
        %441 = vmatprep.subr.bf16.mxu0 0
        %442 = vmatpush1.bf16.msra.mxu0 0
        %443 = vmatprep.subr.bf16.mxu0 0
        %444 = vmatpush1.bf16.msra.mxu0 0
        %445 = vmatprep.mubr.bf16.mxu0 0
        %446 = vmatmul.mubr.bf16.gmra.mrb[0].mxu0 %v349
        %v447 = vpop.f32.mrb[0].mxu0
        %v448 = vadd.f32 0.0, %v447
        %v449 = vpop.f32.mrb[0].mxu0
        %v450 = vpop.f32.mrb[0].mxu0
        %v451 = vadd.f32 0.0, %v450
        %v452 = vpop.f32.mrb[0].mxu0
        %453 = vmatprep.mubr.bf16.mxu0 0
        %454 = vmatmul.mubr.bf16.gmra.mrb[0].mxu0 %v350
        %v455 = vpop.f32.mrb[0].mxu0
        %v456 = vadd.f32 0.0, %v455
        %v457 = vpop.f32.mrb[0].mxu0
        %v458 = vpop.f32.mrb[0].mxu0
        %v459 = vadd.f32 0.0, %v458
        %v460 = vpop.f32.mrb[0].mxu0
        %461 = vmatprep.mubr.bf16.mxu0 0
        %462 = vmatmul.mubr.bf16.gmra.mrb[0].mxu0 %v351
        %v463 = vpop.f32.mrb[0].mxu0
        %v464 = vadd.f32 0.0, %v463
        %v465 = vpop.f32.mrb[0].mxu0
        %v466 = vpop.f32.mrb[0].mxu0
        %v467 = vadd.f32 0.0, %v466
        %v468 = vpop.f32.mrb[0].mxu0
        %469 = vmatprep.mubr.bf16.mxu0 0
        %470 = vmatmul.mubr.bf16.gmra.mrb[0].mxu0 %v352
        %v471 = vpop.f32.mrb[0].mxu0
        %v472 = vadd.f32 0.0, %v471
        %v473 = vpop.f32.mrb[0].mxu0
        %v474 = vpop.f32.mrb[0].mxu0
        %v475 = vadd.f32 0.0, %v474
        %v476 = vpop.f32.mrb[0].mxu0
        %477 = vmatprep.mubr.bf16.mxu0 0
        %478 = vmatmul.mubr.bf16.gmra.mrb[0].mxu0 %v353
        %v479 = vpop.f32.mrb[0].mxu0
        %v480 = vadd.f32 0.0, %v479
        %v481 = vpop.f32.mrb[0].mxu0
        %v482 = vpop.f32.mrb[0].mxu0
        %v483 = vadd.f32 0.0, %v482
        %v484 = vpop.f32.mrb[0].mxu0
        %485 = vmatprep.mubr.bf16.mxu0 0
        %486 = vmatmul.mubr.bf16.gmra.mrb[0].mxu0 %v354
        %v487 = vpop.f32.mrb[0].mxu0
        %v488 = vadd.f32 0.0, %v487
        %v489 = vpop.f32.mrb[0].mxu0
        %v490 = vpop.f32.mrb[0].mxu0
        %v491 = vadd.f32 0.0, %v490
        %v492 = vpop.f32.mrb[0].mxu0
        %493 = vmatprep.mubr.bf16.mxu0 0
        %494 = vmatmul.mubr.bf16.gmra.mrb[0].mxu0 %v355
        %v495 = vpop.f32.mrb[0].mxu0
        %v496 = vadd.f32 0.0, %v495
        %v497 = vpop.f32.mrb[0].mxu0
        %v498 = vpop.f32.mrb[0].mxu0
        %v499 = vadd.f32 0.0, %v498
        %v500 = vpop.f32.mrb[0].mxu0
        %501 = vmatprep.mubr.bf16.mxu0 0
        %502 = vmatmul.mubr.bf16.gmra.mrb[0].mxu0 %v356
        %v503 = vpop.f32.mrb[0].mxu0
        %v504 = vadd.f32 0.0, %v503
        %v505 = vpop.f32.mrb[0].mxu0
        %v506 = vpop.f32.mrb[0].mxu0
        %v507 = vadd.f32 0.0, %v506
        %v508 = vpop.f32.mrb[0].mxu0
        %509 = vdwg.mxu0
        %v510 = vadd.f32 %v269, %v448
        %v511 = vadd.f32 %v270, %v451
        %v512 = vadd.f32 %v271, %v456
        %v513 = vadd.f32 %v272, %v459
        %v514 = vadd.f32 %v273, %v464
        %v515 = vadd.f32 %v274, %v467
        %v516 = vadd.f32 %v275, %v472
        %v517 = vadd.f32 %v276, %v475
        %v518 = vadd.f32 %v277, %v480
        %v519 = vadd.f32 %v278, %v483
        %v520 = vadd.f32 %v279, %v488
        %v521 = vadd.f32 %v280, %v491
        %v522 = vadd.f32 %v281, %v496
        %v523 = vadd.f32 %v282, %v499
        %v524 = vadd.f32 %v283, %v504
        %v525 = vadd.f32 %v284, %v507
        %526 = vst [vmem:[#allocation2] sm:$0xff] %v510
        %527 = vst [vmem:[#allocation2 + $0x8] sm:$0xff] %v511
        %528 = vst [vmem:[#allocation2 + $0x10] sm:$0xff] %v512
        %529 = vst [vmem:[#allocation2 + $0x18] sm:$0xff] %v513
        %530 = vst [vmem:[#allocation2 + $0x20] sm:$0xff] %v514
        %531 = vst [vmem:[#allocation2 + $0x28] sm:$0xff] %v515
        %532 = vst [vmem:[#allocation2 + $0x30] sm:$0xff] %v516
        %533 = vst [vmem:[#allocation2 + $0x38] sm:$0xff] %v517
        %534 = vst [vmem:[#allocation2 + $0x40] sm:$0xff] %v518
        %535 = vst [vmem:[#allocation2 + $0x48] sm:$0xff] %v519
        %536 = vst [vmem:[#allocation2 + $0x50] sm:$0xff] %v520
        %537 = vst [vmem:[#allocation2 + $0x58] sm:$0xff] %v521
        %538 = vst [vmem:[#allocation2 + $0x60] sm:$0xff] %v522
        %539 = vst [vmem:[#allocation2 + $0x68] sm:$0xff] %v523
        %540 = vst [vmem:[#allocation2 + $0x70] sm:$0xff] %v524
        %541 = vst [vmem:[#allocation2 + $0x78] sm:$0xff] %v525
        %p542 = scmp.eq.s32.totalorder %s28, 3
        // Predicated region
        $region45: #{tpu_custom_call.1} parent=31 // pred_check
          %p543 = pneg %p542
        $region46: #{tpu_custom_call.1} parent=31 // pred_check_branch
          %545 = sbr.rel (%p543) target = $region48
        $region47: #{tpu_custom_call.1} parent=31 // pred_region
          %v546 = vld [vmem:[#allocation2] sm:$0xff]
          %v547 = vld [vmem:[#allocation2 + $0x8] sm:$0xff]
          %v548 = vld [vmem:[#allocation2 + $0x10] sm:$0xff]
          %v549 = vld [vmem:[#allocation2 + $0x18] sm:$0xff]
          %v550 = vld [vmem:[#allocation2 + $0x20] sm:$0xff]
          %v551 = vld [vmem:[#allocation2 + $0x28] sm:$0xff]
          %v552 = vld [vmem:[#allocation2 + $0x30] sm:$0xff]
          %v553 = vld [vmem:[#allocation2 + $0x38] sm:$0xff]
          %v554 = vld [vmem:[#allocation2 + $0x40] sm:$0xff]
          %v555 = vld [vmem:[#allocation2 + $0x48] sm:$0xff]
          %v556 = vld [vmem:[#allocation2 + $0x50] sm:$0xff]
          %v557 = vld [vmem:[#allocation2 + $0x58] sm:$0xff]
          %v558 = vld [vmem:[#allocation2 + $0x60] sm:$0xff]
          %v559 = vld [vmem:[#allocation2 + $0x68] sm:$0xff]
          %v560 = vld [vmem:[#allocation2 + $0x70] sm:$0xff]
          %v561 = vld [vmem:[#allocation2 + $0x78] sm:$0xff]
          %v562 = vld [vmem:[%s2] sm:$0x1]
          %v564 = vlaneseq
          %v565 = vshrl.u32 %v564, 7
          %v566 = vsub.s32 0, %v565
          %v567 = vrot.slane %v562, %v566
          %v569 = vadd.f32 %v546, %v567
          %v570 = vadd.f32 %v547, %v567
          %v571 = vadd.f32 %v548, %v567
          %v572 = vadd.f32 %v549, %v567
          %v573 = vadd.f32 %v550, %v567
          %v574 = vadd.f32 %v551, %v567
          %v575 = vadd.f32 %v552, %v567
          %v576 = vadd.f32 %v553, %v567
          %v577 = vadd.f32 %v554, %v567
          %v578 = vadd.f32 %v555, %v567
          %v579 = vadd.f32 %v556, %v567
          %v580 = vadd.f32 %v557, %v567
          %v581 = vadd.f32 %v558, %v567
          %v582 = vadd.f32 %v559, %v567
          %v583 = vadd.f32 %v560, %v567
          %v584 = vadd.f32 %v561, %v567
          %v585 = vand.u32 2147483647, %v569
          %vm586 = vcmp.le.f32.partialorder %v585, 0.7853982
          %vm587 = vcmp.lt.s32.totalorder %v569, 0
          %v588 = vand.u32 %v569, 2139095040
          %v589 = vshrl.u32 %v588, 23
          %v590 = vsub.s32 %v589, 127
          %v591 = vand.u32 2147483647, %v569
          %v592 = vand.u32 %v591, 8388607
          %v593 = vor.u32 %v592, 8388608
          %v594 = vsub.s32 0, %v593
          %v595 = vadd.s32 %v590, 1
          %vm596 = vcmp.gt.s32.totalorder %v595, 0
          %v597 = vsel %vm596, %v595, 0
          %v598 = vshrl.u32 %v597, 5
          %v599 = vand.u32 %v597, 31
          %v600 = vsub.s32 32, %v599
          %v601 = vshrl.u32 683565275, %v600
          %v602 = vshll.u32 683565275, %v599
          %v603 = vshrl.u32 2475754826, %v600
          %v604 = vor.u32 %v602, %v603
          %v605 = vshll.u32 2475754826, %v599
          %v606 = vshrl.u32 2131351028, %v600
          %v607 = vor.u32 %v605, %v606
          %v608 = vshll.u32 2131351028, %v599
          %v609 = vshrl.u32 2102212464, %v600
          %v610 = vor.u32 %v608, %v609
          %v611 = vshll.u32 2102212464, %v599
          %v612 = vshrl.u32 920167782, %v600
          %v613 = vor.u32 %v611, %v612
          %v614 = vshll.u32 920167782, %v599
          %v615 = vshrl.u32 1326507024, %v600
          %v616 = vor.u32 %v614, %v615
          %vm617 = vcmp.lt.s32.totalorder %v598, 1
          %vm618 = vcmp.lt.s32.totalorder %v598, 2
          %vm619 = vcmp.lt.s32.totalorder %v598, 3
          %vm620 = vcmp.lt.s32.totalorder %v598, 4
          %v621 = vsel %vm617, %v601, %v604
          %v622 = vsel %vm620, %v610, 2102212464
          %v623 = vsel %vm619, %v607, %v622
          %v624 = vsel %vm618, %v621, %v623
          %v625 = vsel %vm617, %v604, %v607
          %v626 = vsel %vm620, %v613, 920167782
          %v627 = vsel %vm619, %v610, %v626
          %v628 = vsel %vm618, %v625, %v627
          %v629 = vsel %vm617, %v607, %v610
          %v630 = vsel %vm620, %v616, 1326507024
          %v631 = vsel %vm619, %v613, %v630
          %v632 = vsel %vm618, %v629, %v631
          %v633 = vshll.u32 %v593, 8
          %v634 = vmul.u32.u64.compose %v633, %v632
          %v635 = vextract.low.u32 %v634
          %v636 = vextract.high.u32 %v634
          %v637 = vmul.u32.u64.compose %v633, %v628
          %v638 = vextract.low.u32 %v637
          %v639 = vextract.high.u32 %v637
          %v640 = vmul.u32 %v633, %v624
          %v641 = vadd.s32 %v636, %v638
          %vm642 = vc.u32 %v636, %v638
          %v643 = vadd.s32 %v639, 1
          %v644 = vsel %vm642, %v643, %v639
          %v645 = vadd.s32 %v640, %v644
          %v646 = vadd.s32 %v645, 536870912
          %v647 = vshrl.u32 %v646, 30
          %v648 = vshll.u32 %v647, 30
          %v649 = vsub.s32 %v645, %v648
          %vm650 = vcmp.lt.s32.totalorder %v649, 0
          %v651 = vsub.s32 0, %v649
          %v652 = vsel %vm650, %v651, %v649
          %v653 = vclz %v652
          %v654 = vsub.s32 %v653, 2
          %vm655 = vcmp.gt.s32.totalorder 0, %v654
          %v656 = vsel %vm655, 0, %v654
          %v657 = vsub.s32 32, %v656
          %v658 = vshll.u32 %v649, %v656
          %v659 = vshrl.u32 %v641, %v657
          %v660 = vor.u32 %v658, %v659
          %v661 = vsub.s32 4294967266, %v656
          %v662 = vadd.s32 %v661, 127
          %v663 = vshll.u32 %v662, 23
          %v664 = vor.u32 4788187, %v663
          %v665 = vand.u32 2147483647, %v664
          %v667 = vcvt.s32.f32 %v660
          %v668 = vmul.f32 %v667, %v665
          %v669 = vxor.u32 %v668, 2147483648
          %v670 = vsel %vm587, %v669, %v668
          %v671 = vsub.s32 4, %v647
          %v672 = vsel %vm587, %v671, %v647
          %v673 = vsel %vm586, %v569, %v670
          %v674 = vsel %vm586, 0, %v672
          %v675 = vcosq.f32.pop %v673
          %v676 = vsinq.f32.pop %v673
          %vm677 = vweird.f32 %v569
          %v678 = vand.u32 %v674, 3
          %vm679 = vcmp.lt.s32.totalorder %v678, 2
          %vm680 = vcmp.eq.s32.totalorder %v678, 0
          %v681 = vxor.u32 %v676, 2147483648
          %v682 = vsel %vm680, %v675, %v681
          %vm683 = vcmp.eq.s32.totalorder %v678, 2
          %v684 = vxor.u32 %v675, 2147483648
          %v685 = vsel %vm683, %v684, %v676
          %v686 = vsel %vm679, %v682, %v685
          %v687 = vsel %vm677, nan, %v686
          %v688 = vand.u32 2147483647, %v570
          %vm689 = vcmp.le.f32.partialorder %v688, 0.7853982
          %vm690 = vcmp.lt.s32.totalorder %v570, 0
          %v691 = vand.u32 %v570, 2139095040
          %v692 = vshrl.u32 %v691, 23
          %v693 = vsub.s32 %v692, 127
          %v694 = vand.u32 2147483647, %v570
          %v695 = vand.u32 %v694, 8388607
          %v696 = vor.u32 %v695, 8388608
          %v697 = vsub.s32 0, %v696
          %v698 = vadd.s32 %v693, 1
          %vm699 = vcmp.gt.s32.totalorder %v698, 0
          %v700 = vsel %vm699, %v698, 0
          %v701 = vshrl.u32 %v700, 5
          %v702 = vand.u32 %v700, 31
          %v703 = vsub.s32 32, %v702
          %v704 = vshrl.u32 683565275, %v703
          %v705 = vshll.u32 683565275, %v702
          %v706 = vshrl.u32 2475754826, %v703
          %v707 = vor.u32 %v705, %v706
          %v708 = vshll.u32 2475754826, %v702
          %v709 = vshrl.u32 2131351028, %v703
          %v710 = vor.u32 %v708, %v709
          %v711 = vshll.u32 2131351028, %v702
          %v712 = vshrl.u32 2102212464, %v703
          %v713 = vor.u32 %v711, %v712
          %v714 = vshll.u32 2102212464, %v702
          %v715 = vshrl.u32 920167782, %v703
          %v716 = vor.u32 %v714, %v715
          %v717 = vshll.u32 920167782, %v702
          %v718 = vshrl.u32 1326507024, %v703
          %v719 = vor.u32 %v717, %v718
          %vm720 = vcmp.lt.s32.totalorder %v701, 1
          %vm721 = vcmp.lt.s32.totalorder %v701, 2
          %vm722 = vcmp.lt.s32.totalorder %v701, 3
          %vm723 = vcmp.lt.s32.totalorder %v701, 4
          %v724 = vsel %vm720, %v704, %v707
          %v725 = vsel %vm723, %v713, 2102212464
          %v726 = vsel %vm722, %v710, %v725
          %v727 = vsel %vm721, %v724, %v726
          %v728 = vsel %vm720, %v707, %v710
          %v729 = vsel %vm723, %v716, 920167782
          %v730 = vsel %vm722, %v713, %v729
          %v731 = vsel %vm721, %v728, %v730
          %v732 = vsel %vm720, %v710, %v713
          %v733 = vsel %vm723, %v719, 1326507024
          %v734 = vsel %vm722, %v716, %v733
          %v735 = vsel %vm721, %v732, %v734
          %v736 = vshll.u32 %v696, 8
          %v737 = vmul.u32.u64.compose %v736, %v735
          %v738 = vextract.low.u32 %v737
          %v739 = vextract.high.u32 %v737
          %v740 = vmul.u32.u64.compose %v736, %v731
          %v741 = vextract.low.u32 %v740
          %v742 = vextract.high.u32 %v740
          %v743 = vmul.u32 %v736, %v727
          %v744 = vadd.s32 %v739, %v741
          %vm745 = vc.u32 %v739, %v741
          %v746 = vadd.s32 %v742, 1
          %v747 = vsel %vm745, %v746, %v742
          %v748 = vadd.s32 %v743, %v747
          %v749 = vadd.s32 %v748, 536870912
          %v750 = vshrl.u32 %v749, 30
          %v751 = vshll.u32 %v750, 30
          %v752 = vsub.s32 %v748, %v751
          %vm753 = vcmp.lt.s32.totalorder %v752, 0
          %v754 = vsub.s32 0, %v752
          %v755 = vsel %vm753, %v754, %v752
          %v756 = vclz %v755
          %v757 = vsub.s32 %v756, 2
          %vm758 = vcmp.gt.s32.totalorder 0, %v757
          %v759 = vsel %vm758, 0, %v757
          %v760 = vsub.s32 32, %v759
          %v761 = vshll.u32 %v752, %v759
          %v762 = vshrl.u32 %v744, %v760
          %v763 = vor.u32 %v761, %v762
          %v764 = vsub.s32 4294967266, %v759
          %v765 = vadd.s32 %v764, 127
          %v766 = vshll.u32 %v765, 23
          %v767 = vor.u32 4788187, %v766
          %v768 = vand.u32 2147483647, %v767
          %v770 = vcvt.s32.f32 %v763
          %v771 = vmul.f32 %v770, %v768
          %v772 = vxor.u32 %v771, 2147483648
          %v773 = vsel %vm690, %v772, %v771
          %v774 = vsub.s32 4, %v750
          %v775 = vsel %vm690, %v774, %v750
          %v776 = vsel %vm689, %v570, %v773
          %v777 = vsel %vm689, 0, %v775
          %v778 = vcosq.f32.pop %v776
          %v779 = vsinq.f32.pop %v776
          %vm780 = vweird.f32 %v570
          %v781 = vand.u32 %v777, 3
          %vm782 = vcmp.lt.s32.totalorder %v781, 2
          %vm783 = vcmp.eq.s32.totalorder %v781, 0
          %v784 = vxor.u32 %v779, 2147483648
          %v785 = vsel %vm783, %v778, %v784
          %vm786 = vcmp.eq.s32.totalorder %v781, 2
          %v787 = vxor.u32 %v778, 2147483648
          %v788 = vsel %vm786, %v787, %v779
          %v789 = vsel %vm782, %v785, %v788
          %v790 = vsel %vm780, nan, %v789
          %v791 = vand.u32 2147483647, %v571
          %vm792 = vcmp.le.f32.partialorder %v791, 0.7853982
          %vm793 = vcmp.lt.s32.totalorder %v571, 0
          %v794 = vand.u32 %v571, 2139095040
          %v795 = vshrl.u32 %v794, 23
          %v796 = vsub.s32 %v795, 127
          %v797 = vand.u32 2147483647, %v571
          %v798 = vand.u32 %v797, 8388607
          %v799 = vor.u32 %v798, 8388608
          %v800 = vsub.s32 0, %v799
          %v801 = vadd.s32 %v796, 1
          %vm802 = vcmp.gt.s32.totalorder %v801, 0
          %v803 = vsel %vm802, %v801, 0
          %v804 = vshrl.u32 %v803, 5
          %v805 = vand.u32 %v803, 31
          %v806 = vsub.s32 32, %v805
          %v807 = vshrl.u32 683565275, %v806
          %v808 = vshll.u32 683565275, %v805
          %v809 = vshrl.u32 2475754826, %v806
          %v810 = vor.u32 %v808, %v809
          %v811 = vshll.u32 2475754826, %v805
          %v812 = vshrl.u32 2131351028, %v806
          %v813 = vor.u32 %v811, %v812
          %v814 = vshll.u32 2131351028, %v805
          %v815 = vshrl.u32 2102212464, %v806
          %v816 = vor.u32 %v814, %v815
          %v817 = vshll.u32 2102212464, %v805
          %v818 = vshrl.u32 920167782, %v806
          %v819 = vor.u32 %v817, %v818
          %v820 = vshll.u32 920167782, %v805
          %v821 = vshrl.u32 1326507024, %v806
          %v822 = vor.u32 %v820, %v821
          %vm823 = vcmp.lt.s32.totalorder %v804, 1
          %vm824 = vcmp.lt.s32.totalorder %v804, 2
          %vm825 = vcmp.lt.s32.totalorder %v804, 3
          %vm826 = vcmp.lt.s32.totalorder %v804, 4
          %v827 = vsel %vm823, %v807, %v810
          %v828 = vsel %vm826, %v816, 2102212464
          %v829 = vsel %vm825, %v813, %v828
          %v830 = vsel %vm824, %v827, %v829
          %v831 = vsel %vm823, %v810, %v813
          %v832 = vsel %vm826, %v819, 920167782
          %v833 = vsel %vm825, %v816, %v832
          %v834 = vsel %vm824, %v831, %v833
          %v835 = vsel %vm823, %v813, %v816
          %v836 = vsel %vm826, %v822, 1326507024
          %v837 = vsel %vm825, %v819, %v836
          %v838 = vsel %vm824, %v835, %v837
          %v839 = vshll.u32 %v799, 8
          %v840 = vmul.u32.u64.compose %v839, %v838
          %v841 = vextract.low.u32 %v840
          %v842 = vextract.high.u32 %v840
          %v843 = vmul.u32.u64.compose %v839, %v834
          %v844 = vextract.low.u32 %v843
          %v845 = vextract.high.u32 %v843
          %v846 = vmul.u32 %v839, %v830
          %v847 = vadd.s32 %v842, %v844
          %vm848 = vc.u32 %v842, %v844
          %v849 = vadd.s32 %v845, 1
          %v850 = vsel %vm848, %v849, %v845
          %v851 = vadd.s32 %v846, %v850
          %v852 = vadd.s32 %v851, 536870912
          %v853 = vshrl.u32 %v852, 30
          %v854 = vshll.u32 %v853, 30
          %v855 = vsub.s32 %v851, %v854
          %vm856 = vcmp.lt.s32.totalorder %v855, 0
          %v857 = vsub.s32 0, %v855
          %v858 = vsel %vm856, %v857, %v855
          %v859 = vclz %v858
          %v860 = vsub.s32 %v859, 2
          %vm861 = vcmp.gt.s32.totalorder 0, %v860
          %v862 = vsel %vm861, 0, %v860
          %v863 = vsub.s32 32, %v862
          %v864 = vshll.u32 %v855, %v862
          %v865 = vshrl.u32 %v847, %v863
          %v866 = vor.u32 %v864, %v865
          %v867 = vsub.s32 4294967266, %v862
          %v868 = vadd.s32 %v867, 127
          %v869 = vshll.u32 %v868, 23
          %v870 = vor.u32 4788187, %v869
          %v871 = vand.u32 2147483647, %v870
          %v873 = vcvt.s32.f32 %v866
          %v874 = vmul.f32 %v873, %v871
          %v875 = vxor.u32 %v874, 2147483648
          %v876 = vsel %vm793, %v875, %v874
          %v877 = vsub.s32 4, %v853
          %v878 = vsel %vm793, %v877, %v853
          %v879 = vsel %vm792, %v571, %v876
          %v880 = vsel %vm792, 0, %v878
          %v881 = vcosq.f32.pop %v879
          %v882 = vsinq.f32.pop %v879
          %vm883 = vweird.f32 %v571
          %v884 = vand.u32 %v880, 3
          %vm885 = vcmp.lt.s32.totalorder %v884, 2
          %vm886 = vcmp.eq.s32.totalorder %v884, 0
          %v887 = vxor.u32 %v882, 2147483648
          %v888 = vsel %vm886, %v881, %v887
          %vm889 = vcmp.eq.s32.totalorder %v884, 2
          %v890 = vxor.u32 %v881, 2147483648
          %v891 = vsel %vm889, %v890, %v882
          %v892 = vsel %vm885, %v888, %v891
          %v893 = vsel %vm883, nan, %v892
          %v894 = vand.u32 2147483647, %v572
          %vm895 = vcmp.le.f32.partialorder %v894, 0.7853982
          %vm896 = vcmp.lt.s32.totalorder %v572, 0
          %v897 = vand.u32 %v572, 2139095040
          %v898 = vshrl.u32 %v897, 23
          %v899 = vsub.s32 %v898, 127
          %v900 = vand.u32 2147483647, %v572
          %v901 = vand.u32 %v900, 8388607
          %v902 = vor.u32 %v901, 8388608
          %v903 = vsub.s32 0, %v902
          %v904 = vadd.s32 %v899, 1
          %vm905 = vcmp.gt.s32.totalorder %v904, 0
          %v906 = vsel %vm905, %v904, 0
          %v907 = vshrl.u32 %v906, 5
          %v908 = vand.u32 %v906, 31
          %v909 = vsub.s32 32, %v908
          %v910 = vshrl.u32 683565275, %v909
          %v911 = vshll.u32 683565275, %v908
          %v912 = vshrl.u32 2475754826, %v909
          %v913 = vor.u32 %v911, %v912
          %v914 = vshll.u32 2475754826, %v908
          %v915 = vshrl.u32 2131351028, %v909
          %v916 = vor.u32 %v914, %v915
          %v917 = vshll.u32 2131351028, %v908
          %v918 = vshrl.u32 2102212464, %v909
          %v919 = vor.u32 %v917, %v918
          %v920 = vshll.u32 2102212464, %v908
          %v921 = vshrl.u32 920167782, %v909
          %v922 = vor.u32 %v920, %v921
          %v923 = vshll.u32 920167782, %v908
          %v924 = vshrl.u32 1326507024, %v909
          %v925 = vor.u32 %v923, %v924
          %vm926 = vcmp.lt.s32.totalorder %v907, 1
          %vm927 = vcmp.lt.s32.totalorder %v907, 2
          %vm928 = vcmp.lt.s32.totalorder %v907, 3
          %vm929 = vcmp.lt.s32.totalorder %v907, 4
          %v930 = vsel %vm926, %v910, %v913
          %v931 = vsel %vm929, %v919, 2102212464
          %v932 = vsel %vm928, %v916, %v931
          %v933 = vsel %vm927, %v930, %v932
          %v934 = vsel %vm926, %v913, %v916
          %v935 = vsel %vm929, %v922, 920167782
          %v936 = vsel %vm928, %v919, %v935
          %v937 = vsel %vm927, %v934, %v936
          %v938 = vsel %vm926, %v916, %v919
          %v939 = vsel %vm929, %v925, 1326507024
          %v940 = vsel %vm928, %v922, %v939
          %v941 = vsel %vm927, %v938, %v940
          %v942 = vshll.u32 %v902, 8
          %v943 = vmul.u32.u64.compose %v942, %v941
          %v944 = vextract.low.u32 %v943
          %v945 = vextract.high.u32 %v943
          %v946 = vmul.u32.u64.compose %v942, %v937
          %v947 = vextract.low.u32 %v946
          %v948 = vextract.high.u32 %v946
          %v949 = vmul.u32 %v942, %v933
          %v950 = vadd.s32 %v945, %v947
          %vm951 = vc.u32 %v945, %v947
          %v952 = vadd.s32 %v948, 1
          %v953 = vsel %vm951, %v952, %v948
          %v954 = vadd.s32 %v949, %v953
          %v955 = vadd.s32 %v954, 536870912
          %v956 = vshrl.u32 %v955, 30
          %v957 = vshll.u32 %v956, 30
          %v958 = vsub.s32 %v954, %v957
          %vm959 = vcmp.lt.s32.totalorder %v958, 0
          %v960 = vsub.s32 0, %v958
          %v961 = vsel %vm959, %v960, %v958
          %v962 = vclz %v961
          %v963 = vsub.s32 %v962, 2
          %vm964 = vcmp.gt.s32.totalorder 0, %v963
          %v965 = vsel %vm964, 0, %v963
          %v966 = vsub.s32 32, %v965
          %v967 = vshll.u32 %v958, %v965
          %v968 = vshrl.u32 %v950, %v966
          %v969 = vor.u32 %v967, %v968
          %v970 = vsub.s32 4294967266, %v965
          %v971 = vadd.s32 %v970, 127
          %v972 = vshll.u32 %v971, 23
          %v973 = vor.u32 4788187, %v972
          %v974 = vand.u32 2147483647, %v973
          %v976 = vcvt.s32.f32 %v969
          %v977 = vmul.f32 %v976, %v974
          %v978 = vxor.u32 %v977, 2147483648
          %v979 = vsel %vm896, %v978, %v977
          %v980 = vsub.s32 4, %v956
          %v981 = vsel %vm896, %v980, %v956
          %v982 = vsel %vm895, %v572, %v979
          %v983 = vsel %vm895, 0, %v981
          %v984 = vcosq.f32.pop %v982
          %v985 = vsinq.f32.pop %v982
          %vm986 = vweird.f32 %v572
          %v987 = vand.u32 %v983, 3
          %vm988 = vcmp.lt.s32.totalorder %v987, 2
          %vm989 = vcmp.eq.s32.totalorder %v987, 0
          %v990 = vxor.u32 %v985, 2147483648
          %v991 = vsel %vm989, %v984, %v990
          %vm992 = vcmp.eq.s32.totalorder %v987, 2
          %v993 = vxor.u32 %v984, 2147483648
          %v994 = vsel %vm992, %v993, %v985
          %v995 = vsel %vm988, %v991, %v994
          %v996 = vsel %vm986, nan, %v995
          %v997 = vand.u32 2147483647, %v573
          %vm998 = vcmp.le.f32.partialorder %v997, 0.7853982
          %vm999 = vcmp.lt.s32.totalorder %v573, 0
          %v1000 = vand.u32 %v573, 2139095040
          %v1001 = vshrl.u32 %v1000, 23
          %v1002 = vsub.s32 %v1001, 127
          %v1003 = vand.u32 2147483647, %v573
          %v1004 = vand.u32 %v1003, 8388607
          %v1005 = vor.u32 %v1004, 8388608
          %v1006 = vsub.s32 0, %v1005
          %v1007 = vadd.s32 %v1002, 1
          %vm1008 = vcmp.gt.s32.totalorder %v1007, 0
          %v1009 = vsel %vm1008, %v1007, 0
          %v1010 = vshrl.u32 %v1009, 5
          %v1011 = vand.u32 %v1009, 31
          %v1012 = vsub.s32 32, %v1011
          %v1013 = vshrl.u32 683565275, %v1012
          %v1014 = vshll.u32 683565275, %v1011
          %v1015 = vshrl.u32 2475754826, %v1012
          %v1016 = vor.u32 %v1014, %v1015
          %v1017 = vshll.u32 2475754826, %v1011
          %v1018 = vshrl.u32 2131351028, %v1012
          %v1019 = vor.u32 %v1017, %v1018
          %v1020 = vshll.u32 2131351028, %v1011
          %v1021 = vshrl.u32 2102212464, %v1012
          %v1022 = vor.u32 %v1020, %v1021
          %v1023 = vshll.u32 2102212464, %v1011
          %v1024 = vshrl.u32 920167782, %v1012
          %v1025 = vor.u32 %v1023, %v1024
          %v1026 = vshll.u32 920167782, %v1011
          %v1027 = vshrl.u32 1326507024, %v1012
          %v1028 = vor.u32 %v1026, %v1027
          %vm1029 = vcmp.lt.s32.totalorder %v1010, 1
          %vm1030 = vcmp.lt.s32.totalorder %v1010, 2
          %vm1031 = vcmp.lt.s32.totalorder %v1010, 3
          %vm1032 = vcmp.lt.s32.totalorder %v1010, 4
          %v1033 = vsel %vm1029, %v1013, %v1016
          %v1034 = vsel %vm1032, %v1022, 2102212464
          %v1035 = vsel %vm1031, %v1019, %v1034
          %v1036 = vsel %vm1030, %v1033, %v1035
          %v1037 = vsel %vm1029, %v1016, %v1019
          %v1038 = vsel %vm1032, %v1025, 920167782
          %v1039 = vsel %vm1031, %v1022, %v1038
          %v1040 = vsel %vm1030, %v1037, %v1039
          %v1041 = vsel %vm1029, %v1019, %v1022
          %v1042 = vsel %vm1032, %v1028, 1326507024
          %v1043 = vsel %vm1031, %v1025, %v1042
          %v1044 = vsel %vm1030, %v1041, %v1043
          %v1045 = vshll.u32 %v1005, 8
          %v1046 = vmul.u32.u64.compose %v1045, %v1044
          %v1047 = vextract.low.u32 %v1046
          %v1048 = vextract.high.u32 %v1046
          %v1049 = vmul.u32.u64.compose %v1045, %v1040
          %v1050 = vextract.low.u32 %v1049
          %v1051 = vextract.high.u32 %v1049
          %v1052 = vmul.u32 %v1045, %v1036
          %v1053 = vadd.s32 %v1048, %v1050
          %vm1054 = vc.u32 %v1048, %v1050
          %v1055 = vadd.s32 %v1051, 1
          %v1056 = vsel %vm1054, %v1055, %v1051
          %v1057 = vadd.s32 %v1052, %v1056
          %v1058 = vadd.s32 %v1057, 536870912
          %v1059 = vshrl.u32 %v1058, 30
          %v1060 = vshll.u32 %v1059, 30
          %v1061 = vsub.s32 %v1057, %v1060
          %vm1062 = vcmp.lt.s32.totalorder %v1061, 0
          %v1063 = vsub.s32 0, %v1061
          %v1064 = vsel %vm1062, %v1063, %v1061
          %v1065 = vclz %v1064
          %v1066 = vsub.s32 %v1065, 2
          %vm1067 = vcmp.gt.s32.totalorder 0, %v1066
          %v1068 = vsel %vm1067, 0, %v1066
          %v1069 = vsub.s32 32, %v1068
          %v1070 = vshll.u32 %v1061, %v1068
          %v1071 = vshrl.u32 %v1053, %v1069
          %v1072 = vor.u32 %v1070, %v1071
          %v1073 = vsub.s32 4294967266, %v1068
          %v1074 = vadd.s32 %v1073, 127
          %v1075 = vshll.u32 %v1074, 23
          %v1076 = vor.u32 4788187, %v1075
          %v1077 = vand.u32 2147483647, %v1076
          %v1079 = vcvt.s32.f32 %v1072
          %v1080 = vmul.f32 %v1079, %v1077
          %v1081 = vxor.u32 %v1080, 2147483648
          %v1082 = vsel %vm999, %v1081, %v1080
          %v1083 = vsub.s32 4, %v1059
          %v1084 = vsel %vm999, %v1083, %v1059
          %v1085 = vsel %vm998, %v573, %v1082
          %v1086 = vsel %vm998, 0, %v1084
          %v1087 = vcosq.f32.pop %v1085
          %v1088 = vsinq.f32.pop %v1085
          %vm1089 = vweird.f32 %v573
          %v1090 = vand.u32 %v1086, 3
          %vm1091 = vcmp.lt.s32.totalorder %v1090, 2
          %vm1092 = vcmp.eq.s32.totalorder %v1090, 0
          %v1093 = vxor.u32 %v1088, 2147483648
          %v1094 = vsel %vm1092, %v1087, %v1093
          %vm1095 = vcmp.eq.s32.totalorder %v1090, 2
          %v1096 = vxor.u32 %v1087, 2147483648
          %v1097 = vsel %vm1095, %v1096, %v1088
          %v1098 = vsel %vm1091, %v1094, %v1097
          %v1099 = vsel %vm1089, nan, %v1098
          %v1100 = vand.u32 2147483647, %v574
          %vm1101 = vcmp.le.f32.partialorder %v1100, 0.7853982
          %vm1102 = vcmp.lt.s32.totalorder %v574, 0
          %v1103 = vand.u32 %v574, 2139095040
          %v1104 = vshrl.u32 %v1103, 23
          %v1105 = vsub.s32 %v1104, 127
          %v1106 = vand.u32 2147483647, %v574
          %v1107 = vand.u32 %v1106, 8388607
          %v1108 = vor.u32 %v1107, 8388608
          %v1109 = vsub.s32 0, %v1108
          %v1110 = vadd.s32 %v1105, 1
          %vm1111 = vcmp.gt.s32.totalorder %v1110, 0
          %v1112 = vsel %vm1111, %v1110, 0
          %v1113 = vshrl.u32 %v1112, 5
          %v1114 = vand.u32 %v1112, 31
          %v1115 = vsub.s32 32, %v1114
          %v1116 = vshrl.u32 683565275, %v1115
          %v1117 = vshll.u32 683565275, %v1114
          %v1118 = vshrl.u32 2475754826, %v1115
          %v1119 = vor.u32 %v1117, %v1118
          %v1120 = vshll.u32 2475754826, %v1114
          %v1121 = vshrl.u32 2131351028, %v1115
          %v1122 = vor.u32 %v1120, %v1121
          %v1123 = vshll.u32 2131351028, %v1114
          %v1124 = vshrl.u32 2102212464, %v1115
          %v1125 = vor.u32 %v1123, %v1124
          %v1126 = vshll.u32 2102212464, %v1114
          %v1127 = vshrl.u32 920167782, %v1115
          %v1128 = vor.u32 %v1126, %v1127
          %v1129 = vshll.u32 920167782, %v1114
          %v1130 = vshrl.u32 1326507024, %v1115
          %v1131 = vor.u32 %v1129, %v1130
          %vm1132 = vcmp.lt.s32.totalorder %v1113, 1
          %vm1133 = vcmp.lt.s32.totalorder %v1113, 2
          %vm1134 = vcmp.lt.s32.totalorder %v1113, 3
          %vm1135 = vcmp.lt.s32.totalorder %v1113, 4
          %v1136 = vsel %vm1132, %v1116, %v1119
          %v1137 = vsel %vm1135, %v1125, 2102212464
          %v1138 = vsel %vm1134, %v1122, %v1137
          %v1139 = vsel %vm1133, %v1136, %v1138
          %v1140 = vsel %vm1132, %v1119, %v1122
          %v1141 = vsel %vm1135, %v1128, 920167782
          %v1142 = vsel %vm1134, %v1125, %v1141
          %v1143 = vsel %vm1133, %v1140, %v1142
          %v1144 = vsel %vm1132, %v1122, %v1125
          %v1145 = vsel %vm1135, %v1131, 1326507024
          %v1146 = vsel %vm1134, %v1128, %v1145
          %v1147 = vsel %vm1133, %v1144, %v1146
          %v1148 = vshll.u32 %v1108, 8
          %v1149 = vmul.u32.u64.compose %v1148, %v1147
          %v1150 = vextract.low.u32 %v1149
          %v1151 = vextract.high.u32 %v1149
          %v1152 = vmul.u32.u64.compose %v1148, %v1143
          %v1153 = vextract.low.u32 %v1152
          %v1154 = vextract.high.u32 %v1152
          %v1155 = vmul.u32 %v1148, %v1139
          %v1156 = vadd.s32 %v1151, %v1153
          %vm1157 = vc.u32 %v1151, %v1153
          %v1158 = vadd.s32 %v1154, 1
          %v1159 = vsel %vm1157, %v1158, %v1154
          %v1160 = vadd.s32 %v1155, %v1159
          %v1161 = vadd.s32 %v1160, 536870912
          %v1162 = vshrl.u32 %v1161, 30
          %v1163 = vshll.u32 %v1162, 30
          %v1164 = vsub.s32 %v1160, %v1163
          %vm1165 = vcmp.lt.s32.totalorder %v1164, 0
          %v1166 = vsub.s32 0, %v1164
          %v1167 = vsel %vm1165, %v1166, %v1164
          %v1168 = vclz %v1167
          %v1169 = vsub.s32 %v1168, 2
          %vm1170 = vcmp.gt.s32.totalorder 0, %v1169
          %v1171 = vsel %vm1170, 0, %v1169
          %v1172 = vsub.s32 32, %v1171
          %v1173 = vshll.u32 %v1164, %v1171
          %v1174 = vshrl.u32 %v1156, %v1172
          %v1175 = vor.u32 %v1173, %v1174
          %v1176 = vsub.s32 4294967266, %v1171
          %v1177 = vadd.s32 %v1176, 127
          %v1178 = vshll.u32 %v1177, 23
          %v1179 = vor.u32 4788187, %v1178
          %v1180 = vand.u32 2147483647, %v1179
          %v1182 = vcvt.s32.f32 %v1175
          %v1183 = vmul.f32 %v1182, %v1180
          %v1184 = vxor.u32 %v1183, 2147483648
          %v1185 = vsel %vm1102, %v1184, %v1183
          %v1186 = vsub.s32 4, %v1162
          %v1187 = vsel %vm1102, %v1186, %v1162
          %v1188 = vsel %vm1101, %v574, %v1185
          %v1189 = vsel %vm1101, 0, %v1187
          %v1190 = vcosq.f32.pop %v1188
          %v1191 = vsinq.f32.pop %v1188
          %vm1192 = vweird.f32 %v574
          %v1193 = vand.u32 %v1189, 3
          %vm1194 = vcmp.lt.s32.totalorder %v1193, 2
          %vm1195 = vcmp.eq.s32.totalorder %v1193, 0
          %v1196 = vxor.u32 %v1191, 2147483648
          %v1197 = vsel %vm1195, %v1190, %v1196
          %vm1198 = vcmp.eq.s32.totalorder %v1193, 2
          %v1199 = vxor.u32 %v1190, 2147483648
          %v1200 = vsel %vm1198, %v1199, %v1191
          %v1201 = vsel %vm1194, %v1197, %v1200
          %v1202 = vsel %vm1192, nan, %v1201
          %v1203 = vand.u32 2147483647, %v575
          %vm1204 = vcmp.le.f32.partialorder %v1203, 0.7853982
          %vm1205 = vcmp.lt.s32.totalorder %v575, 0
          %v1206 = vand.u32 %v575, 2139095040
          %v1207 = vshrl.u32 %v1206, 23
          %v1208 = vsub.s32 %v1207, 127
          %v1209 = vand.u32 2147483647, %v575
          %v1210 = vand.u32 %v1209, 8388607
          %v1211 = vor.u32 %v1210, 8388608
          %v1212 = vsub.s32 0, %v1211
          %v1213 = vadd.s32 %v1208, 1
          %vm1214 = vcmp.gt.s32.totalorder %v1213, 0
          %v1215 = vsel %vm1214, %v1213, 0
          %v1216 = vshrl.u32 %v1215, 5
          %v1217 = vand.u32 %v1215, 31
          %v1218 = vsub.s32 32, %v1217
          %v1219 = vshrl.u32 683565275, %v1218
          %v1220 = vshll.u32 683565275, %v1217
          %v1221 = vshrl.u32 2475754826, %v1218
          %v1222 = vor.u32 %v1220, %v1221
          %v1223 = vshll.u32 2475754826, %v1217
          %v1224 = vshrl.u32 2131351028, %v1218
          %v1225 = vor.u32 %v1223, %v1224
          %v1226 = vshll.u32 2131351028, %v1217
          %v1227 = vshrl.u32 2102212464, %v1218
          %v1228 = vor.u32 %v1226, %v1227
          %v1229 = vshll.u32 2102212464, %v1217
          %v1230 = vshrl.u32 920167782, %v1218
          %v1231 = vor.u32 %v1229, %v1230
          %v1232 = vshll.u32 920167782, %v1217
          %v1233 = vshrl.u32 1326507024, %v1218
          %v1234 = vor.u32 %v1232, %v1233
          %vm1235 = vcmp.lt.s32.totalorder %v1216, 1
          %vm1236 = vcmp.lt.s32.totalorder %v1216, 2
          %vm1237 = vcmp.lt.s32.totalorder %v1216, 3
          %vm1238 = vcmp.lt.s32.totalorder %v1216, 4
          %v1239 = vsel %vm1235, %v1219, %v1222
          %v1240 = vsel %vm1238, %v1228, 2102212464
          %v1241 = vsel %vm1237, %v1225, %v1240
          %v1242 = vsel %vm1236, %v1239, %v1241
          %v1243 = vsel %vm1235, %v1222, %v1225
          %v1244 = vsel %vm1238, %v1231, 920167782
          %v1245 = vsel %vm1237, %v1228, %v1244
          %v1246 = vsel %vm1236, %v1243, %v1245
          %v1247 = vsel %vm1235, %v1225, %v1228
          %v1248 = vsel %vm1238, %v1234, 1326507024
          %v1249 = vsel %vm1237, %v1231, %v1248
          %v1250 = vsel %vm1236, %v1247, %v1249
          %v1251 = vshll.u32 %v1211, 8
          %v1252 = vmul.u32.u64.compose %v1251, %v1250
          %v1253 = vextract.low.u32 %v1252
          %v1254 = vextract.high.u32 %v1252
          %v1255 = vmul.u32.u64.compose %v1251, %v1246
          %v1256 = vextract.low.u32 %v1255
          %v1257 = vextract.high.u32 %v1255
          %v1258 = vmul.u32 %v1251, %v1242
          %v1259 = vadd.s32 %v1254, %v1256
          %vm1260 = vc.u32 %v1254, %v1256
          %v1261 = vadd.s32 %v1257, 1
          %v1262 = vsel %vm1260, %v1261, %v1257
          %v1263 = vadd.s32 %v1258, %v1262
          %v1264 = vadd.s32 %v1263, 536870912
          %v1265 = vshrl.u32 %v1264, 30
          %v1266 = vshll.u32 %v1265, 30
          %v1267 = vsub.s32 %v1263, %v1266
          %vm1268 = vcmp.lt.s32.totalorder %v1267, 0
          %v1269 = vsub.s32 0, %v1267
          %v1270 = vsel %vm1268, %v1269, %v1267
          %v1271 = vclz %v1270
          %v1272 = vsub.s32 %v1271, 2
          %vm1273 = vcmp.gt.s32.totalorder 0, %v1272
          %v1274 = vsel %vm1273, 0, %v1272
          %v1275 = vsub.s32 32, %v1274
          %v1276 = vshll.u32 %v1267, %v1274
          %v1277 = vshrl.u32 %v1259, %v1275
          %v1278 = vor.u32 %v1276, %v1277
          %v1279 = vsub.s32 4294967266, %v1274
          %v1280 = vadd.s32 %v1279, 127
          %v1281 = vshll.u32 %v1280, 23
          %v1282 = vor.u32 4788187, %v1281
          %v1283 = vand.u32 2147483647, %v1282
          %v1285 = vcvt.s32.f32 %v1278
          %v1286 = vmul.f32 %v1285, %v1283
          %v1287 = vxor.u32 %v1286, 2147483648
          %v1288 = vsel %vm1205, %v1287, %v1286
          %v1289 = vsub.s32 4, %v1265
          %v1290 = vsel %vm1205, %v1289, %v1265
          %v1291 = vsel %vm1204, %v575, %v1288
          %v1292 = vsel %vm1204, 0, %v1290
          %v1293 = vcosq.f32.pop %v1291
          %v1294 = vsinq.f32.pop %v1291
          %vm1295 = vweird.f32 %v575
          %v1296 = vand.u32 %v1292, 3
          %vm1297 = vcmp.lt.s32.totalorder %v1296, 2
          %vm1298 = vcmp.eq.s32.totalorder %v1296, 0
          %v1299 = vxor.u32 %v1294, 2147483648
          %v1300 = vsel %vm1298, %v1293, %v1299
          %vm1301 = vcmp.eq.s32.totalorder %v1296, 2
          %v1302 = vxor.u32 %v1293, 2147483648
          %v1303 = vsel %vm1301, %v1302, %v1294
          %v1304 = vsel %vm1297, %v1300, %v1303
          %v1305 = vsel %vm1295, nan, %v1304
          %v1306 = vand.u32 2147483647, %v576
          %vm1307 = vcmp.le.f32.partialorder %v1306, 0.7853982
          %vm1308 = vcmp.lt.s32.totalorder %v576, 0
          %v1309 = vand.u32 %v576, 2139095040
          %v1310 = vshrl.u32 %v1309, 23
          %v1311 = vsub.s32 %v1310, 127
          %v1312 = vand.u32 2147483647, %v576
          %v1313 = vand.u32 %v1312, 8388607
          %v1314 = vor.u32 %v1313, 8388608
          %v1315 = vsub.s32 0, %v1314
          %v1316 = vadd.s32 %v1311, 1
          %vm1317 = vcmp.gt.s32.totalorder %v1316, 0
          %v1318 = vsel %vm1317, %v1316, 0
          %v1319 = vshrl.u32 %v1318, 5
          %v1320 = vand.u32 %v1318, 31
          %v1321 = vsub.s32 32, %v1320
          %v1322 = vshrl.u32 683565275, %v1321
          %v1323 = vshll.u32 683565275, %v1320
          %v1324 = vshrl.u32 2475754826, %v1321
          %v1325 = vor.u32 %v1323, %v1324
          %v1326 = vshll.u32 2475754826, %v1320
          %v1327 = vshrl.u32 2131351028, %v1321
          %v1328 = vor.u32 %v1326, %v1327
          %v1329 = vshll.u32 2131351028, %v1320
          %v1330 = vshrl.u32 2102212464, %v1321
          %v1331 = vor.u32 %v1329, %v1330
          %v1332 = vshll.u32 2102212464, %v1320
          %v1333 = vshrl.u32 920167782, %v1321
          %v1334 = vor.u32 %v1332, %v1333
          %v1335 = vshll.u32 920167782, %v1320
          %v1336 = vshrl.u32 1326507024, %v1321
          %v1337 = vor.u32 %v1335, %v1336
          %vm1338 = vcmp.lt.s32.totalorder %v1319, 1
          %vm1339 = vcmp.lt.s32.totalorder %v1319, 2
          %vm1340 = vcmp.lt.s32.totalorder %v1319, 3
          %vm1341 = vcmp.lt.s32.totalorder %v1319, 4
          %v1342 = vsel %vm1338, %v1322, %v1325
          %v1343 = vsel %vm1341, %v1331, 2102212464
          %v1344 = vsel %vm1340, %v1328, %v1343
          %v1345 = vsel %vm1339, %v1342, %v1344
          %v1346 = vsel %vm1338, %v1325, %v1328
          %v1347 = vsel %vm1341, %v1334, 920167782
          %v1348 = vsel %vm1340, %v1331, %v1347
          %v1349 = vsel %vm1339, %v1346, %v1348
          %v1350 = vsel %vm1338, %v1328, %v1331
          %v1351 = vsel %vm1341, %v1337, 1326507024
          %v1352 = vsel %vm1340, %v1334, %v1351
          %v1353 = vsel %vm1339, %v1350, %v1352
          %v1354 = vshll.u32 %v1314, 8
          %v1355 = vmul.u32.u64.compose %v1354, %v1353
          %v1356 = vextract.low.u32 %v1355
          %v1357 = vextract.high.u32 %v1355
          %v1358 = vmul.u32.u64.compose %v1354, %v1349
          %v1359 = vextract.low.u32 %v1358
          %v1360 = vextract.high.u32 %v1358
          %v1361 = vmul.u32 %v1354, %v1345
          %v1362 = vadd.s32 %v1357, %v1359
          %vm1363 = vc.u32 %v1357, %v1359
          %v1364 = vadd.s32 %v1360, 1
          %v1365 = vsel %vm1363, %v1364, %v1360
          %v1366 = vadd.s32 %v1361, %v1365
          %v1367 = vadd.s32 %v1366, 536870912
          %v1368 = vshrl.u32 %v1367, 30
          %v1369 = vshll.u32 %v1368, 30
          %v1370 = vsub.s32 %v1366, %v1369
          %vm1371 = vcmp.lt.s32.totalorder %v1370, 0
          %v1372 = vsub.s32 0, %v1370
          %v1373 = vsel %vm1371, %v1372, %v1370
          %v1374 = vclz %v1373
          %v1375 = vsub.s32 %v1374, 2
          %vm1376 = vcmp.gt.s32.totalorder 0, %v1375
          %v1377 = vsel %vm1376, 0, %v1375
          %v1378 = vsub.s32 32, %v1377
          %v1379 = vshll.u32 %v1370, %v1377
          %v1380 = vshrl.u32 %v1362, %v1378
          %v1381 = vor.u32 %v1379, %v1380
          %v1382 = vsub.s32 4294967266, %v1377
          %v1383 = vadd.s32 %v1382, 127
          %v1384 = vshll.u32 %v1383, 23
          %v1385 = vor.u32 4788187, %v1384
          %v1386 = vand.u32 2147483647, %v1385
          %v1388 = vcvt.s32.f32 %v1381
          %v1389 = vmul.f32 %v1388, %v1386
          %v1390 = vxor.u32 %v1389, 2147483648
          %v1391 = vsel %vm1308, %v1390, %v1389
          %v1392 = vsub.s32 4, %v1368
          %v1393 = vsel %vm1308, %v1392, %v1368
          %v1394 = vsel %vm1307, %v576, %v1391
          %v1395 = vsel %vm1307, 0, %v1393
          %v1396 = vcosq.f32.pop %v1394
          %v1397 = vsinq.f32.pop %v1394
          %vm1398 = vweird.f32 %v576
          %v1399 = vand.u32 %v1395, 3
          %vm1400 = vcmp.lt.s32.totalorder %v1399, 2
          %vm1401 = vcmp.eq.s32.totalorder %v1399, 0
          %v1402 = vxor.u32 %v1397, 2147483648
          %v1403 = vsel %vm1401, %v1396, %v1402
          %vm1404 = vcmp.eq.s32.totalorder %v1399, 2
          %v1405 = vxor.u32 %v1396, 2147483648
          %v1406 = vsel %vm1404, %v1405, %v1397
          %v1407 = vsel %vm1400, %v1403, %v1406
          %v1408 = vsel %vm1398, nan, %v1407
          %v1409 = vand.u32 2147483647, %v577
          %vm1410 = vcmp.le.f32.partialorder %v1409, 0.7853982
          %vm1411 = vcmp.lt.s32.totalorder %v577, 0
          %v1412 = vand.u32 %v577, 2139095040
          %v1413 = vshrl.u32 %v1412, 23
          %v1414 = vsub.s32 %v1413, 127
          %v1415 = vand.u32 2147483647, %v577
          %v1416 = vand.u32 %v1415, 8388607
          %v1417 = vor.u32 %v1416, 8388608
          %v1418 = vsub.s32 0, %v1417
          %v1419 = vadd.s32 %v1414, 1
          %vm1420 = vcmp.gt.s32.totalorder %v1419, 0
          %v1421 = vsel %vm1420, %v1419, 0
          %v1422 = vshrl.u32 %v1421, 5
          %v1423 = vand.u32 %v1421, 31
          %v1424 = vsub.s32 32, %v1423
          %v1425 = vshrl.u32 683565275, %v1424
          %v1426 = vshll.u32 683565275, %v1423
          %v1427 = vshrl.u32 2475754826, %v1424
          %v1428 = vor.u32 %v1426, %v1427
          %v1429 = vshll.u32 2475754826, %v1423
          %v1430 = vshrl.u32 2131351028, %v1424
          %v1431 = vor.u32 %v1429, %v1430
          %v1432 = vshll.u32 2131351028, %v1423
          %v1433 = vshrl.u32 2102212464, %v1424
          %v1434 = vor.u32 %v1432, %v1433
          %v1435 = vshll.u32 2102212464, %v1423
          %v1436 = vshrl.u32 920167782, %v1424
          %v1437 = vor.u32 %v1435, %v1436
          %v1438 = vshll.u32 920167782, %v1423
          %v1439 = vshrl.u32 1326507024, %v1424
          %v1440 = vor.u32 %v1438, %v1439
          %vm1441 = vcmp.lt.s32.totalorder %v1422, 1
          %vm1442 = vcmp.lt.s32.totalorder %v1422, 2
          %vm1443 = vcmp.lt.s32.totalorder %v1422, 3
          %vm1444 = vcmp.lt.s32.totalorder %v1422, 4
          %v1445 = vsel %vm1441, %v1425, %v1428
          %v1446 = vsel %vm1444, %v1434, 2102212464
          %v1447 = vsel %vm1443, %v1431, %v1446
          %v1448 = vsel %vm1442, %v1445, %v1447
          %v1449 = vsel %vm1441, %v1428, %v1431
          %v1450 = vsel %vm1444, %v1437, 920167782
          %v1451 = vsel %vm1443, %v1434, %v1450
          %v1452 = vsel %vm1442, %v1449, %v1451
          %v1453 = vsel %vm1441, %v1431, %v1434
          %v1454 = vsel %vm1444, %v1440, 1326507024
          %v1455 = vsel %vm1443, %v1437, %v1454
          %v1456 = vsel %vm1442, %v1453, %v1455
          %v1457 = vshll.u32 %v1417, 8
          %v1458 = vmul.u32.u64.compose %v1457, %v1456
          %v1459 = vextract.low.u32 %v1458
          %v1460 = vextract.high.u32 %v1458
          %v1461 = vmul.u32.u64.compose %v1457, %v1452
          %v1462 = vextract.low.u32 %v1461
          %v1463 = vextract.high.u32 %v1461
          %v1464 = vmul.u32 %v1457, %v1448
          %v1465 = vadd.s32 %v1460, %v1462
          %vm1466 = vc.u32 %v1460, %v1462
          %v1467 = vadd.s32 %v1463, 1
          %v1468 = vsel %vm1466, %v1467, %v1463
          %v1469 = vadd.s32 %v1464, %v1468
          %v1470 = vadd.s32 %v1469, 536870912
          %v1471 = vshrl.u32 %v1470, 30
          %v1472 = vshll.u32 %v1471, 30
          %v1473 = vsub.s32 %v1469, %v1472
          %vm1474 = vcmp.lt.s32.totalorder %v1473, 0
          %v1475 = vsub.s32 0, %v1473
          %v1476 = vsel %vm1474, %v1475, %v1473
          %v1477 = vclz %v1476
          %v1478 = vsub.s32 %v1477, 2
          %vm1479 = vcmp.gt.s32.totalorder 0, %v1478
          %v1480 = vsel %vm1479, 0, %v1478
          %v1481 = vsub.s32 32, %v1480
          %v1482 = vshll.u32 %v1473, %v1480
          %v1483 = vshrl.u32 %v1465, %v1481
          %v1484 = vor.u32 %v1482, %v1483
          %v1485 = vsub.s32 4294967266, %v1480
          %v1486 = vadd.s32 %v1485, 127
          %v1487 = vshll.u32 %v1486, 23
          %v1488 = vor.u32 4788187, %v1487
          %v1489 = vand.u32 2147483647, %v1488
          %v1491 = vcvt.s32.f32 %v1484
          %v1492 = vmul.f32 %v1491, %v1489
          %v1493 = vxor.u32 %v1492, 2147483648
          %v1494 = vsel %vm1411, %v1493, %v1492
          %v1495 = vsub.s32 4, %v1471
          %v1496 = vsel %vm1411, %v1495, %v1471
          %v1497 = vsel %vm1410, %v577, %v1494
          %v1498 = vsel %vm1410, 0, %v1496
          %v1499 = vcosq.f32.pop %v1497
          %v1500 = vsinq.f32.pop %v1497
          %vm1501 = vweird.f32 %v577
          %v1502 = vand.u32 %v1498, 3
          %vm1503 = vcmp.lt.s32.totalorder %v1502, 2
          %vm1504 = vcmp.eq.s32.totalorder %v1502, 0
          %v1505 = vxor.u32 %v1500, 2147483648
          %v1506 = vsel %vm1504, %v1499, %v1505
          %vm1507 = vcmp.eq.s32.totalorder %v1502, 2
          %v1508 = vxor.u32 %v1499, 2147483648
          %v1509 = vsel %vm1507, %v1508, %v1500
          %v1510 = vsel %vm1503, %v1506, %v1509
          %v1511 = vsel %vm1501, nan, %v1510
          %v1512 = vand.u32 2147483647, %v578
          %vm1513 = vcmp.le.f32.partialorder %v1512, 0.7853982
          %vm1514 = vcmp.lt.s32.totalorder %v578, 0
          %v1515 = vand.u32 %v578, 2139095040
          %v1516 = vshrl.u32 %v1515, 23
          %v1517 = vsub.s32 %v1516, 127
          %v1518 = vand.u32 2147483647, %v578
          %v1519 = vand.u32 %v1518, 8388607
          %v1520 = vor.u32 %v1519, 8388608
          %v1521 = vsub.s32 0, %v1520
          %v1522 = vadd.s32 %v1517, 1
          %vm1523 = vcmp.gt.s32.totalorder %v1522, 0
          %v1524 = vsel %vm1523, %v1522, 0
          %v1525 = vshrl.u32 %v1524, 5
          %v1526 = vand.u32 %v1524, 31
          %v1527 = vsub.s32 32, %v1526
          %v1528 = vshrl.u32 683565275, %v1527
          %v1529 = vshll.u32 683565275, %v1526
          %v1530 = vshrl.u32 2475754826, %v1527
          %v1531 = vor.u32 %v1529, %v1530
          %v1532 = vshll.u32 2475754826, %v1526
          %v1533 = vshrl.u32 2131351028, %v1527
          %v1534 = vor.u32 %v1532, %v1533
          %v1535 = vshll.u32 2131351028, %v1526
          %v1536 = vshrl.u32 2102212464, %v1527
          %v1537 = vor.u32 %v1535, %v1536
          %v1538 = vshll.u32 2102212464, %v1526
          %v1539 = vshrl.u32 920167782, %v1527
          %v1540 = vor.u32 %v1538, %v1539
          %v1541 = vshll.u32 920167782, %v1526
          %v1542 = vshrl.u32 1326507024, %v1527
          %v1543 = vor.u32 %v1541, %v1542
          %vm1544 = vcmp.lt.s32.totalorder %v1525, 1
          %vm1545 = vcmp.lt.s32.totalorder %v1525, 2
          %vm1546 = vcmp.lt.s32.totalorder %v1525, 3
          %vm1547 = vcmp.lt.s32.totalorder %v1525, 4
          %v1548 = vsel %vm1544, %v1528, %v1531
          %v1549 = vsel %vm1547, %v1537, 2102212464
          %v1550 = vsel %vm1546, %v1534, %v1549
          %v1551 = vsel %vm1545, %v1548, %v1550
          %v1552 = vsel %vm1544, %v1531, %v1534
          %v1553 = vsel %vm1547, %v1540, 920167782
          %v1554 = vsel %vm1546, %v1537, %v1553
          %v1555 = vsel %vm1545, %v1552, %v1554
          %v1556 = vsel %vm1544, %v1534, %v1537
          %v1557 = vsel %vm1547, %v1543, 1326507024
          %v1558 = vsel %vm1546, %v1540, %v1557
          %v1559 = vsel %vm1545, %v1556, %v1558
          %v1560 = vshll.u32 %v1520, 8
          %v1561 = vmul.u32.u64.compose %v1560, %v1559
          %v1562 = vextract.low.u32 %v1561
          %v1563 = vextract.high.u32 %v1561
          %v1564 = vmul.u32.u64.compose %v1560, %v1555
          %v1565 = vextract.low.u32 %v1564
          %v1566 = vextract.high.u32 %v1564
          %v1567 = vmul.u32 %v1560, %v1551
          %v1568 = vadd.s32 %v1563, %v1565
          %vm1569 = vc.u32 %v1563, %v1565
          %v1570 = vadd.s32 %v1566, 1
          %v1571 = vsel %vm1569, %v1570, %v1566
          %v1572 = vadd.s32 %v1567, %v1571
          %v1573 = vadd.s32 %v1572, 536870912
          %v1574 = vshrl.u32 %v1573, 30
          %v1575 = vshll.u32 %v1574, 30
          %v1576 = vsub.s32 %v1572, %v1575
          %vm1577 = vcmp.lt.s32.totalorder %v1576, 0
          %v1578 = vsub.s32 0, %v1576
          %v1579 = vsel %vm1577, %v1578, %v1576
          %v1580 = vclz %v1579
          %v1581 = vsub.s32 %v1580, 2
          %vm1582 = vcmp.gt.s32.totalorder 0, %v1581
          %v1583 = vsel %vm1582, 0, %v1581
          %v1584 = vsub.s32 32, %v1583
          %v1585 = vshll.u32 %v1576, %v1583
          %v1586 = vshrl.u32 %v1568, %v1584
          %v1587 = vor.u32 %v1585, %v1586
          %v1588 = vsub.s32 4294967266, %v1583
          %v1589 = vadd.s32 %v1588, 127
          %v1590 = vshll.u32 %v1589, 23
          %v1591 = vor.u32 4788187, %v1590
          %v1592 = vand.u32 2147483647, %v1591
          %v1594 = vcvt.s32.f32 %v1587
          %v1595 = vmul.f32 %v1594, %v1592
          %v1596 = vxor.u32 %v1595, 2147483648
          %v1597 = vsel %vm1514, %v1596, %v1595
          %v1598 = vsub.s32 4, %v1574
          %v1599 = vsel %vm1514, %v1598, %v1574
          %v1600 = vsel %vm1513, %v578, %v1597
          %v1601 = vsel %vm1513, 0, %v1599
          %v1602 = vcosq.f32.pop %v1600
          %v1603 = vsinq.f32.pop %v1600
          %vm1604 = vweird.f32 %v578
          %v1605 = vand.u32 %v1601, 3
          %vm1606 = vcmp.lt.s32.totalorder %v1605, 2
          %vm1607 = vcmp.eq.s32.totalorder %v1605, 0
          %v1608 = vxor.u32 %v1603, 2147483648
          %v1609 = vsel %vm1607, %v1602, %v1608
          %vm1610 = vcmp.eq.s32.totalorder %v1605, 2
          %v1611 = vxor.u32 %v1602, 2147483648
          %v1612 = vsel %vm1610, %v1611, %v1603
          %v1613 = vsel %vm1606, %v1609, %v1612
          %v1614 = vsel %vm1604, nan, %v1613
          %v1615 = vand.u32 2147483647, %v579
          %vm1616 = vcmp.le.f32.partialorder %v1615, 0.7853982
          %vm1617 = vcmp.lt.s32.totalorder %v579, 0
          %v1618 = vand.u32 %v579, 2139095040
          %v1619 = vshrl.u32 %v1618, 23
          %v1620 = vsub.s32 %v1619, 127
          %v1621 = vand.u32 2147483647, %v579
          %v1622 = vand.u32 %v1621, 8388607
          %v1623 = vor.u32 %v1622, 8388608
          %v1624 = vsub.s32 0, %v1623
          %v1625 = vadd.s32 %v1620, 1
          %vm1626 = vcmp.gt.s32.totalorder %v1625, 0
          %v1627 = vsel %vm1626, %v1625, 0
          %v1628 = vshrl.u32 %v1627, 5
          %v1629 = vand.u32 %v1627, 31
          %v1630 = vsub.s32 32, %v1629
          %v1631 = vshrl.u32 683565275, %v1630
          %v1632 = vshll.u32 683565275, %v1629
          %v1633 = vshrl.u32 2475754826, %v1630
          %v1634 = vor.u32 %v1632, %v1633
          %v1635 = vshll.u32 2475754826, %v1629
          %v1636 = vshrl.u32 2131351028, %v1630
          %v1637 = vor.u32 %v1635, %v1636
          %v1638 = vshll.u32 2131351028, %v1629
          %v1639 = vshrl.u32 2102212464, %v1630
          %v1640 = vor.u32 %v1638, %v1639
          %v1641 = vshll.u32 2102212464, %v1629
          %v1642 = vshrl.u32 920167782, %v1630
          %v1643 = vor.u32 %v1641, %v1642
          %v1644 = vshll.u32 920167782, %v1629
          %v1645 = vshrl.u32 1326507024, %v1630
          %v1646 = vor.u32 %v1644, %v1645
          %vm1647 = vcmp.lt.s32.totalorder %v1628, 1
          %vm1648 = vcmp.lt.s32.totalorder %v1628, 2
          %vm1649 = vcmp.lt.s32.totalorder %v1628, 3
          %vm1650 = vcmp.lt.s32.totalorder %v1628, 4
          %v1651 = vsel %vm1647, %v1631, %v1634
          %v1652 = vsel %vm1650, %v1640, 2102212464
          %v1653 = vsel %vm1649, %v1637, %v1652
          %v1654 = vsel %vm1648, %v1651, %v1653
          %v1655 = vsel %vm1647, %v1634, %v1637
          %v1656 = vsel %vm1650, %v1643, 920167782
          %v1657 = vsel %vm1649, %v1640, %v1656
          %v1658 = vsel %vm1648, %v1655, %v1657
          %v1659 = vsel %vm1647, %v1637, %v1640
          %v1660 = vsel %vm1650, %v1646, 1326507024
          %v1661 = vsel %vm1649, %v1643, %v1660
          %v1662 = vsel %vm1648, %v1659, %v1661
          %v1663 = vshll.u32 %v1623, 8
          %v1664 = vmul.u32.u64.compose %v1663, %v1662
          %v1665 = vextract.low.u32 %v1664
          %v1666 = vextract.high.u32 %v1664
          %v1667 = vmul.u32.u64.compose %v1663, %v1658
          %v1668 = vextract.low.u32 %v1667
          %v1669 = vextract.high.u32 %v1667
          %v1670 = vmul.u32 %v1663, %v1654
          %v1671 = vadd.s32 %v1666, %v1668
          %vm1672 = vc.u32 %v1666, %v1668
          %v1673 = vadd.s32 %v1669, 1
          %v1674 = vsel %vm1672, %v1673, %v1669
          %v1675 = vadd.s32 %v1670, %v1674
          %v1676 = vadd.s32 %v1675, 536870912
          %v1677 = vshrl.u32 %v1676, 30
          %v1678 = vshll.u32 %v1677, 30
          %v1679 = vsub.s32 %v1675, %v1678
          %vm1680 = vcmp.lt.s32.totalorder %v1679, 0
          %v1681 = vsub.s32 0, %v1679
          %v1682 = vsel %vm1680, %v1681, %v1679
          %v1683 = vclz %v1682
          %v1684 = vsub.s32 %v1683, 2
          %vm1685 = vcmp.gt.s32.totalorder 0, %v1684
          %v1686 = vsel %vm1685, 0, %v1684
          %v1687 = vsub.s32 32, %v1686
          %v1688 = vshll.u32 %v1679, %v1686
          %v1689 = vshrl.u32 %v1671, %v1687
          %v1690 = vor.u32 %v1688, %v1689
          %v1691 = vsub.s32 4294967266, %v1686
          %v1692 = vadd.s32 %v1691, 127
          %v1693 = vshll.u32 %v1692, 23
          %v1694 = vor.u32 4788187, %v1693
          %v1695 = vand.u32 2147483647, %v1694
          %v1697 = vcvt.s32.f32 %v1690
          %v1698 = vmul.f32 %v1697, %v1695
          %v1699 = vxor.u32 %v1698, 2147483648
          %v1700 = vsel %vm1617, %v1699, %v1698
          %v1701 = vsub.s32 4, %v1677
          %v1702 = vsel %vm1617, %v1701, %v1677
          %v1703 = vsel %vm1616, %v579, %v1700
          %v1704 = vsel %vm1616, 0, %v1702
          %v1705 = vcosq.f32.pop %v1703
          %v1706 = vsinq.f32.pop %v1703
          %vm1707 = vweird.f32 %v579
          %v1708 = vand.u32 %v1704, 3
          %vm1709 = vcmp.lt.s32.totalorder %v1708, 2
          %vm1710 = vcmp.eq.s32.totalorder %v1708, 0
          %v1711 = vxor.u32 %v1706, 2147483648
          %v1712 = vsel %vm1710, %v1705, %v1711
          %vm1713 = vcmp.eq.s32.totalorder %v1708, 2
          %v1714 = vxor.u32 %v1705, 2147483648
          %v1715 = vsel %vm1713, %v1714, %v1706
          %v1716 = vsel %vm1709, %v1712, %v1715
          %v1717 = vsel %vm1707, nan, %v1716
          %v1718 = vand.u32 2147483647, %v580
          %vm1719 = vcmp.le.f32.partialorder %v1718, 0.7853982
          %vm1720 = vcmp.lt.s32.totalorder %v580, 0
          %v1721 = vand.u32 %v580, 2139095040
          %v1722 = vshrl.u32 %v1721, 23
          %v1723 = vsub.s32 %v1722, 127
          %v1724 = vand.u32 2147483647, %v580
          %v1725 = vand.u32 %v1724, 8388607
          %v1726 = vor.u32 %v1725, 8388608
          %v1727 = vsub.s32 0, %v1726
          %v1728 = vadd.s32 %v1723, 1
          %vm1729 = vcmp.gt.s32.totalorder %v1728, 0
          %v1730 = vsel %vm1729, %v1728, 0
          %v1731 = vshrl.u32 %v1730, 5
          %v1732 = vand.u32 %v1730, 31
          %v1733 = vsub.s32 32, %v1732
          %v1734 = vshrl.u32 683565275, %v1733
          %v1735 = vshll.u32 683565275, %v1732
          %v1736 = vshrl.u32 2475754826, %v1733
          %v1737 = vor.u32 %v1735, %v1736
          %v1738 = vshll.u32 2475754826, %v1732
          %v1739 = vshrl.u32 2131351028, %v1733
          %v1740 = vor.u32 %v1738, %v1739
          %v1741 = vshll.u32 2131351028, %v1732
          %v1742 = vshrl.u32 2102212464, %v1733
          %v1743 = vor.u32 %v1741, %v1742
          %v1744 = vshll.u32 2102212464, %v1732
          %v1745 = vshrl.u32 920167782, %v1733
          %v1746 = vor.u32 %v1744, %v1745
          %v1747 = vshll.u32 920167782, %v1732
          %v1748 = vshrl.u32 1326507024, %v1733
          %v1749 = vor.u32 %v1747, %v1748
          %vm1750 = vcmp.lt.s32.totalorder %v1731, 1
          %vm1751 = vcmp.lt.s32.totalorder %v1731, 2
          %vm1752 = vcmp.lt.s32.totalorder %v1731, 3
          %vm1753 = vcmp.lt.s32.totalorder %v1731, 4
          %v1754 = vsel %vm1750, %v1734, %v1737
          %v1755 = vsel %vm1753, %v1743, 2102212464
          %v1756 = vsel %vm1752, %v1740, %v1755
          %v1757 = vsel %vm1751, %v1754, %v1756
          %v1758 = vsel %vm1750, %v1737, %v1740
          %v1759 = vsel %vm1753, %v1746, 920167782
          %v1760 = vsel %vm1752, %v1743, %v1759
          %v1761 = vsel %vm1751, %v1758, %v1760
          %v1762 = vsel %vm1750, %v1740, %v1743
          %v1763 = vsel %vm1753, %v1749, 1326507024
          %v1764 = vsel %vm1752, %v1746, %v1763
          %v1765 = vsel %vm1751, %v1762, %v1764
          %v1766 = vshll.u32 %v1726, 8
          %v1767 = vmul.u32.u64.compose %v1766, %v1765
          %v1768 = vextract.low.u32 %v1767
          %v1769 = vextract.high.u32 %v1767
          %v1770 = vmul.u32.u64.compose %v1766, %v1761
          %v1771 = vextract.low.u32 %v1770
          %v1772 = vextract.high.u32 %v1770
          %v1773 = vmul.u32 %v1766, %v1757
          %v1774 = vadd.s32 %v1769, %v1771
          %vm1775 = vc.u32 %v1769, %v1771
          %v1776 = vadd.s32 %v1772, 1
          %v1777 = vsel %vm1775, %v1776, %v1772
          %v1778 = vadd.s32 %v1773, %v1777
          %v1779 = vadd.s32 %v1778, 536870912
          %v1780 = vshrl.u32 %v1779, 30
          %v1781 = vshll.u32 %v1780, 30
          %v1782 = vsub.s32 %v1778, %v1781
          %vm1783 = vcmp.lt.s32.totalorder %v1782, 0
          %v1784 = vsub.s32 0, %v1782
          %v1785 = vsel %vm1783, %v1784, %v1782
          %v1786 = vclz %v1785
          %v1787 = vsub.s32 %v1786, 2
          %vm1788 = vcmp.gt.s32.totalorder 0, %v1787
          %v1789 = vsel %vm1788, 0, %v1787
          %v1790 = vsub.s32 32, %v1789
          %v1791 = vshll.u32 %v1782, %v1789
          %v1792 = vshrl.u32 %v1774, %v1790
          %v1793 = vor.u32 %v1791, %v1792
          %v1794 = vsub.s32 4294967266, %v1789
          %v1795 = vadd.s32 %v1794, 127
          %v1796 = vshll.u32 %v1795, 23
          %v1797 = vor.u32 4788187, %v1796
          %v1798 = vand.u32 2147483647, %v1797
          %v1800 = vcvt.s32.f32 %v1793
          %v1801 = vmul.f32 %v1800, %v1798
          %v1802 = vxor.u32 %v1801, 2147483648
          %v1803 = vsel %vm1720, %v1802, %v1801
          %v1804 = vsub.s32 4, %v1780
          %v1805 = vsel %vm1720, %v1804, %v1780
          %v1806 = vsel %vm1719, %v580, %v1803
          %v1807 = vsel %vm1719, 0, %v1805
          %v1808 = vcosq.f32.pop %v1806
          %v1809 = vsinq.f32.pop %v1806
          %vm1810 = vweird.f32 %v580
          %v1811 = vand.u32 %v1807, 3
          %vm1812 = vcmp.lt.s32.totalorder %v1811, 2
          %vm1813 = vcmp.eq.s32.totalorder %v1811, 0
          %v1814 = vxor.u32 %v1809, 2147483648
          %v1815 = vsel %vm1813, %v1808, %v1814
          %vm1816 = vcmp.eq.s32.totalorder %v1811, 2
          %v1817 = vxor.u32 %v1808, 2147483648
          %v1818 = vsel %vm1816, %v1817, %v1809
          %v1819 = vsel %vm1812, %v1815, %v1818
          %v1820 = vsel %vm1810, nan, %v1819
          %v1821 = vand.u32 2147483647, %v581
          %vm1822 = vcmp.le.f32.partialorder %v1821, 0.7853982
          %vm1823 = vcmp.lt.s32.totalorder %v581, 0
          %v1824 = vand.u32 %v581, 2139095040
          %v1825 = vshrl.u32 %v1824, 23
          %v1826 = vsub.s32 %v1825, 127
          %v1827 = vand.u32 2147483647, %v581
          %v1828 = vand.u32 %v1827, 8388607
          %v1829 = vor.u32 %v1828, 8388608
          %v1830 = vsub.s32 0, %v1829
          %v1831 = vadd.s32 %v1826, 1
          %vm1832 = vcmp.gt.s32.totalorder %v1831, 0
          %v1833 = vsel %vm1832, %v1831, 0
          %v1834 = vshrl.u32 %v1833, 5
          %v1835 = vand.u32 %v1833, 31
          %v1836 = vsub.s32 32, %v1835
          %v1837 = vshrl.u32 683565275, %v1836
          %v1838 = vshll.u32 683565275, %v1835
          %v1839 = vshrl.u32 2475754826, %v1836
          %v1840 = vor.u32 %v1838, %v1839
          %v1841 = vshll.u32 2475754826, %v1835
          %v1842 = vshrl.u32 2131351028, %v1836
          %v1843 = vor.u32 %v1841, %v1842
          %v1844 = vshll.u32 2131351028, %v1835
          %v1845 = vshrl.u32 2102212464, %v1836
          %v1846 = vor.u32 %v1844, %v1845
          %v1847 = vshll.u32 2102212464, %v1835
          %v1848 = vshrl.u32 920167782, %v1836
          %v1849 = vor.u32 %v1847, %v1848
          %v1850 = vshll.u32 920167782, %v1835
          %v1851 = vshrl.u32 1326507024, %v1836
          %v1852 = vor.u32 %v1850, %v1851
          %vm1853 = vcmp.lt.s32.totalorder %v1834, 1
          %vm1854 = vcmp.lt.s32.totalorder %v1834, 2
          %vm1855 = vcmp.lt.s32.totalorder %v1834, 3
          %vm1856 = vcmp.lt.s32.totalorder %v1834, 4
          %v1857 = vsel %vm1853, %v1837, %v1840
          %v1858 = vsel %vm1856, %v1846, 2102212464
          %v1859 = vsel %vm1855, %v1843, %v1858
          %v1860 = vsel %vm1854, %v1857, %v1859
          %v1861 = vsel %vm1853, %v1840, %v1843
          %v1862 = vsel %vm1856, %v1849, 920167782
          %v1863 = vsel %vm1855, %v1846, %v1862
          %v1864 = vsel %vm1854, %v1861, %v1863
          %v1865 = vsel %vm1853, %v1843, %v1846
          %v1866 = vsel %vm1856, %v1852, 1326507024
          %v1867 = vsel %vm1855, %v1849, %v1866
          %v1868 = vsel %vm1854, %v1865, %v1867
          %v1869 = vshll.u32 %v1829, 8
          %v1870 = vmul.u32.u64.compose %v1869, %v1868
          %v1871 = vextract.low.u32 %v1870
          %v1872 = vextract.high.u32 %v1870
          %v1873 = vmul.u32.u64.compose %v1869, %v1864
          %v1874 = vextract.low.u32 %v1873
          %v1875 = vextract.high.u32 %v1873
          %v1876 = vmul.u32 %v1869, %v1860
          %v1877 = vadd.s32 %v1872, %v1874
          %vm1878 = vc.u32 %v1872, %v1874
          %v1879 = vadd.s32 %v1875, 1
          %v1880 = vsel %vm1878, %v1879, %v1875
          %v1881 = vadd.s32 %v1876, %v1880
          %v1882 = vadd.s32 %v1881, 536870912
          %v1883 = vshrl.u32 %v1882, 30
          %v1884 = vshll.u32 %v1883, 30
          %v1885 = vsub.s32 %v1881, %v1884
          %vm1886 = vcmp.lt.s32.totalorder %v1885, 0
          %v1887 = vsub.s32 0, %v1885
          %v1888 = vsel %vm1886, %v1887, %v1885
          %v1889 = vclz %v1888
          %v1890 = vsub.s32 %v1889, 2
          %vm1891 = vcmp.gt.s32.totalorder 0, %v1890
          %v1892 = vsel %vm1891, 0, %v1890
          %v1893 = vsub.s32 32, %v1892
          %v1894 = vshll.u32 %v1885, %v1892
          %v1895 = vshrl.u32 %v1877, %v1893
          %v1896 = vor.u32 %v1894, %v1895
          %v1897 = vsub.s32 4294967266, %v1892
          %v1898 = vadd.s32 %v1897, 127
          %v1899 = vshll.u32 %v1898, 23
          %v1900 = vor.u32 4788187, %v1899
          %v1901 = vand.u32 2147483647, %v1900
          %v1903 = vcvt.s32.f32 %v1896
          %v1904 = vmul.f32 %v1903, %v1901
          %v1905 = vxor.u32 %v1904, 2147483648
          %v1906 = vsel %vm1823, %v1905, %v1904
          %v1907 = vsub.s32 4, %v1883
          %v1908 = vsel %vm1823, %v1907, %v1883
          %v1909 = vsel %vm1822, %v581, %v1906
          %v1910 = vsel %vm1822, 0, %v1908
          %v1911 = vcosq.f32.pop %v1909
          %v1912 = vsinq.f32.pop %v1909
          %vm1913 = vweird.f32 %v581
          %v1914 = vand.u32 %v1910, 3
          %vm1915 = vcmp.lt.s32.totalorder %v1914, 2
          %vm1916 = vcmp.eq.s32.totalorder %v1914, 0
          %v1917 = vxor.u32 %v1912, 2147483648
          %v1918 = vsel %vm1916, %v1911, %v1917
          %vm1919 = vcmp.eq.s32.totalorder %v1914, 2
          %v1920 = vxor.u32 %v1911, 2147483648
          %v1921 = vsel %vm1919, %v1920, %v1912
          %v1922 = vsel %vm1915, %v1918, %v1921
          %v1923 = vsel %vm1913, nan, %v1922
          %v1924 = vand.u32 2147483647, %v582
          %vm1925 = vcmp.le.f32.partialorder %v1924, 0.7853982
          %vm1926 = vcmp.lt.s32.totalorder %v582, 0
          %v1927 = vand.u32 %v582, 2139095040
          %v1928 = vshrl.u32 %v1927, 23
          %v1929 = vsub.s32 %v1928, 127
          %v1930 = vand.u32 2147483647, %v582
          %v1931 = vand.u32 %v1930, 8388607
          %v1932 = vor.u32 %v1931, 8388608
          %v1933 = vsub.s32 0, %v1932
          %v1934 = vadd.s32 %v1929, 1
          %vm1935 = vcmp.gt.s32.totalorder %v1934, 0
          %v1936 = vsel %vm1935, %v1934, 0
          %v1937 = vshrl.u32 %v1936, 5
          %v1938 = vand.u32 %v1936, 31
          %v1939 = vsub.s32 32, %v1938
          %v1940 = vshrl.u32 683565275, %v1939
          %v1941 = vshll.u32 683565275, %v1938
          %v1942 = vshrl.u32 2475754826, %v1939
          %v1943 = vor.u32 %v1941, %v1942
          %v1944 = vshll.u32 2475754826, %v1938
          %v1945 = vshrl.u32 2131351028, %v1939
          %v1946 = vor.u32 %v1944, %v1945
          %v1947 = vshll.u32 2131351028, %v1938
          %v1948 = vshrl.u32 2102212464, %v1939
          %v1949 = vor.u32 %v1947, %v1948
          %v1950 = vshll.u32 2102212464, %v1938
          %v1951 = vshrl.u32 920167782, %v1939
          %v1952 = vor.u32 %v1950, %v1951
          %v1953 = vshll.u32 920167782, %v1938
          %v1954 = vshrl.u32 1326507024, %v1939
          %v1955 = vor.u32 %v1953, %v1954
          %vm1956 = vcmp.lt.s32.totalorder %v1937, 1
          %vm1957 = vcmp.lt.s32.totalorder %v1937, 2
          %vm1958 = vcmp.lt.s32.totalorder %v1937, 3
          %vm1959 = vcmp.lt.s32.totalorder %v1937, 4
          %v1960 = vsel %vm1956, %v1940, %v1943
          %v1961 = vsel %vm1959, %v1949, 2102212464
          %v1962 = vsel %vm1958, %v1946, %v1961
          %v1963 = vsel %vm1957, %v1960, %v1962
          %v1964 = vsel %vm1956, %v1943, %v1946
          %v1965 = vsel %vm1959, %v1952, 920167782
          %v1966 = vsel %vm1958, %v1949, %v1965
          %v1967 = vsel %vm1957, %v1964, %v1966
          %v1968 = vsel %vm1956, %v1946, %v1949
          %v1969 = vsel %vm1959, %v1955, 1326507024
          %v1970 = vsel %vm1958, %v1952, %v1969
          %v1971 = vsel %vm1957, %v1968, %v1970
          %v1972 = vshll.u32 %v1932, 8
          %v1973 = vmul.u32.u64.compose %v1972, %v1971
          %v1974 = vextract.low.u32 %v1973
          %v1975 = vextract.high.u32 %v1973
          %v1976 = vmul.u32.u64.compose %v1972, %v1967
          %v1977 = vextract.low.u32 %v1976
          %v1978 = vextract.high.u32 %v1976
          %v1979 = vmul.u32 %v1972, %v1963
          %v1980 = vadd.s32 %v1975, %v1977
          %vm1981 = vc.u32 %v1975, %v1977
          %v1982 = vadd.s32 %v1978, 1
          %v1983 = vsel %vm1981, %v1982, %v1978
          %v1984 = vadd.s32 %v1979, %v1983
          %v1985 = vadd.s32 %v1984, 536870912
          %v1986 = vshrl.u32 %v1985, 30
          %v1987 = vshll.u32 %v1986, 30
          %v1988 = vsub.s32 %v1984, %v1987
          %vm1989 = vcmp.lt.s32.totalorder %v1988, 0
          %v1990 = vsub.s32 0, %v1988
          %v1991 = vsel %vm1989, %v1990, %v1988
          %v1992 = vclz %v1991
          %v1993 = vsub.s32 %v1992, 2
          %vm1994 = vcmp.gt.s32.totalorder 0, %v1993
          %v1995 = vsel %vm1994, 0, %v1993
          %v1996 = vsub.s32 32, %v1995
          %v1997 = vshll.u32 %v1988, %v1995
          %v1998 = vshrl.u32 %v1980, %v1996
          %v1999 = vor.u32 %v1997, %v1998
          %v2000 = vsub.s32 4294967266, %v1995
          %v2001 = vadd.s32 %v2000, 127
          %v2002 = vshll.u32 %v2001, 23
          %v2003 = vor.u32 4788187, %v2002
          %v2004 = vand.u32 2147483647, %v2003
          %v2006 = vcvt.s32.f32 %v1999
          %v2007 = vmul.f32 %v2006, %v2004
          %v2008 = vxor.u32 %v2007, 2147483648
          %v2009 = vsel %vm1926, %v2008, %v2007
          %v2010 = vsub.s32 4, %v1986
          %v2011 = vsel %vm1926, %v2010, %v1986
          %v2012 = vsel %vm1925, %v582, %v2009
          %v2013 = vsel %vm1925, 0, %v2011
          %v2014 = vcosq.f32.pop %v2012
          %v2015 = vsinq.f32.pop %v2012
          %vm2016 = vweird.f32 %v582
          %v2017 = vand.u32 %v2013, 3
          %vm2018 = vcmp.lt.s32.totalorder %v2017, 2
          %vm2019 = vcmp.eq.s32.totalorder %v2017, 0
          %v2020 = vxor.u32 %v2015, 2147483648
          %v2021 = vsel %vm2019, %v2014, %v2020
          %vm2022 = vcmp.eq.s32.totalorder %v2017, 2
          %v2023 = vxor.u32 %v2014, 2147483648
          %v2024 = vsel %vm2022, %v2023, %v2015
          %v2025 = vsel %vm2018, %v2021, %v2024
          %v2026 = vsel %vm2016, nan, %v2025
          %v2027 = vand.u32 2147483647, %v583
          %vm2028 = vcmp.le.f32.partialorder %v2027, 0.7853982
          %vm2029 = vcmp.lt.s32.totalorder %v583, 0
          %v2030 = vand.u32 %v583, 2139095040
          %v2031 = vshrl.u32 %v2030, 23
          %v2032 = vsub.s32 %v2031, 127
          %v2033 = vand.u32 2147483647, %v583
          %v2034 = vand.u32 %v2033, 8388607
          %v2035 = vor.u32 %v2034, 8388608
          %v2036 = vsub.s32 0, %v2035
          %v2037 = vadd.s32 %v2032, 1
          %vm2038 = vcmp.gt.s32.totalorder %v2037, 0
          %v2039 = vsel %vm2038, %v2037, 0
          %v2040 = vshrl.u32 %v2039, 5
          %v2041 = vand.u32 %v2039, 31
          %v2042 = vsub.s32 32, %v2041
          %v2043 = vshrl.u32 683565275, %v2042
          %v2044 = vshll.u32 683565275, %v2041
          %v2045 = vshrl.u32 2475754826, %v2042
          %v2046 = vor.u32 %v2044, %v2045
          %v2047 = vshll.u32 2475754826, %v2041
          %v2048 = vshrl.u32 2131351028, %v2042
          %v2049 = vor.u32 %v2047, %v2048
          %v2050 = vshll.u32 2131351028, %v2041
          %v2051 = vshrl.u32 2102212464, %v2042
          %v2052 = vor.u32 %v2050, %v2051
          %v2053 = vshll.u32 2102212464, %v2041
          %v2054 = vshrl.u32 920167782, %v2042
          %v2055 = vor.u32 %v2053, %v2054
          %v2056 = vshll.u32 920167782, %v2041
          %v2057 = vshrl.u32 1326507024, %v2042
          %v2058 = vor.u32 %v2056, %v2057
          %vm2059 = vcmp.lt.s32.totalorder %v2040, 1
          %vm2060 = vcmp.lt.s32.totalorder %v2040, 2
          %vm2061 = vcmp.lt.s32.totalorder %v2040, 3
          %vm2062 = vcmp.lt.s32.totalorder %v2040, 4
          %v2063 = vsel %vm2059, %v2043, %v2046
          %v2064 = vsel %vm2062, %v2052, 2102212464
          %v2065 = vsel %vm2061, %v2049, %v2064
          %v2066 = vsel %vm2060, %v2063, %v2065
          %v2067 = vsel %vm2059, %v2046, %v2049
          %v2068 = vsel %vm2062, %v2055, 920167782
          %v2069 = vsel %vm2061, %v2052, %v2068
          %v2070 = vsel %vm2060, %v2067, %v2069
          %v2071 = vsel %vm2059, %v2049, %v2052
          %v2072 = vsel %vm2062, %v2058, 1326507024
          %v2073 = vsel %vm2061, %v2055, %v2072
          %v2074 = vsel %vm2060, %v2071, %v2073
          %v2075 = vshll.u32 %v2035, 8
          %v2076 = vmul.u32.u64.compose %v2075, %v2074
          %v2077 = vextract.low.u32 %v2076
          %v2078 = vextract.high.u32 %v2076
          %v2079 = vmul.u32.u64.compose %v2075, %v2070
          %v2080 = vextract.low.u32 %v2079
          %v2081 = vextract.high.u32 %v2079
          %v2082 = vmul.u32 %v2075, %v2066
          %v2083 = vadd.s32 %v2078, %v2080
          %vm2084 = vc.u32 %v2078, %v2080
          %v2085 = vadd.s32 %v2081, 1
          %v2086 = vsel %vm2084, %v2085, %v2081
          %v2087 = vadd.s32 %v2082, %v2086
          %v2088 = vadd.s32 %v2087, 536870912
          %v2089 = vshrl.u32 %v2088, 30
          %v2090 = vshll.u32 %v2089, 30
          %v2091 = vsub.s32 %v2087, %v2090
          %vm2092 = vcmp.lt.s32.totalorder %v2091, 0
          %v2093 = vsub.s32 0, %v2091
          %v2094 = vsel %vm2092, %v2093, %v2091
          %v2095 = vclz %v2094
          %v2096 = vsub.s32 %v2095, 2
          %vm2097 = vcmp.gt.s32.totalorder 0, %v2096
          %v2098 = vsel %vm2097, 0, %v2096
          %v2099 = vsub.s32 32, %v2098
          %v2100 = vshll.u32 %v2091, %v2098
          %v2101 = vshrl.u32 %v2083, %v2099
          %v2102 = vor.u32 %v2100, %v2101
          %v2103 = vsub.s32 4294967266, %v2098
          %v2104 = vadd.s32 %v2103, 127
          %v2105 = vshll.u32 %v2104, 23
          %v2106 = vor.u32 4788187, %v2105
          %v2107 = vand.u32 2147483647, %v2106
          %v2109 = vcvt.s32.f32 %v2102
          %v2110 = vmul.f32 %v2109, %v2107
          %v2111 = vxor.u32 %v2110, 2147483648
          %v2112 = vsel %vm2029, %v2111, %v2110
          %v2113 = vsub.s32 4, %v2089
          %v2114 = vsel %vm2029, %v2113, %v2089
          %v2115 = vsel %vm2028, %v583, %v2112
          %v2116 = vsel %vm2028, 0, %v2114
          %v2117 = vcosq.f32.pop %v2115
          %v2118 = vsinq.f32.pop %v2115
          %vm2119 = vweird.f32 %v583
          %v2120 = vand.u32 %v2116, 3
          %vm2121 = vcmp.lt.s32.totalorder %v2120, 2
          %vm2122 = vcmp.eq.s32.totalorder %v2120, 0
          %v2123 = vxor.u32 %v2118, 2147483648
          %v2124 = vsel %vm2122, %v2117, %v2123
          %vm2125 = vcmp.eq.s32.totalorder %v2120, 2
          %v2126 = vxor.u32 %v2117, 2147483648
          %v2127 = vsel %vm2125, %v2126, %v2118
          %v2128 = vsel %vm2121, %v2124, %v2127
          %v2129 = vsel %vm2119, nan, %v2128
          %v2130 = vand.u32 2147483647, %v584
          %vm2131 = vcmp.le.f32.partialorder %v2130, 0.7853982
          %vm2132 = vcmp.lt.s32.totalorder %v584, 0
          %v2133 = vand.u32 %v584, 2139095040
          %v2134 = vshrl.u32 %v2133, 23
          %v2135 = vsub.s32 %v2134, 127
          %v2136 = vand.u32 2147483647, %v584
          %v2137 = vand.u32 %v2136, 8388607
          %v2138 = vor.u32 %v2137, 8388608
          %v2139 = vsub.s32 0, %v2138
          %v2140 = vadd.s32 %v2135, 1
          %vm2141 = vcmp.gt.s32.totalorder %v2140, 0
          %v2142 = vsel %vm2141, %v2140, 0
          %v2143 = vshrl.u32 %v2142, 5
          %v2144 = vand.u32 %v2142, 31
          %v2145 = vsub.s32 32, %v2144
          %v2146 = vshrl.u32 683565275, %v2145
          %v2147 = vshll.u32 683565275, %v2144
          %v2148 = vshrl.u32 2475754826, %v2145
          %v2149 = vor.u32 %v2147, %v2148
          %v2150 = vshll.u32 2475754826, %v2144
          %v2151 = vshrl.u32 2131351028, %v2145
          %v2152 = vor.u32 %v2150, %v2151
          %v2153 = vshll.u32 2131351028, %v2144
          %v2154 = vshrl.u32 2102212464, %v2145
          %v2155 = vor.u32 %v2153, %v2154
          %v2156 = vshll.u32 2102212464, %v2144
          %v2157 = vshrl.u32 920167782, %v2145
          %v2158 = vor.u32 %v2156, %v2157
          %v2159 = vshll.u32 920167782, %v2144
          %v2160 = vshrl.u32 1326507024, %v2145
          %v2161 = vor.u32 %v2159, %v2160
          %vm2162 = vcmp.lt.s32.totalorder %v2143, 1
          %vm2163 = vcmp.lt.s32.totalorder %v2143, 2
          %vm2164 = vcmp.lt.s32.totalorder %v2143, 3
          %vm2165 = vcmp.lt.s32.totalorder %v2143, 4
          %v2166 = vsel %vm2162, %v2146, %v2149
          %v2167 = vsel %vm2165, %v2155, 2102212464
          %v2168 = vsel %vm2164, %v2152, %v2167
          %v2169 = vsel %vm2163, %v2166, %v2168
          %v2170 = vsel %vm2162, %v2149, %v2152
          %v2171 = vsel %vm2165, %v2158, 920167782
          %v2172 = vsel %vm2164, %v2155, %v2171
          %v2173 = vsel %vm2163, %v2170, %v2172
          %v2174 = vsel %vm2162, %v2152, %v2155
          %v2175 = vsel %vm2165, %v2161, 1326507024
          %v2176 = vsel %vm2164, %v2158, %v2175
          %v2177 = vsel %vm2163, %v2174, %v2176
          %v2178 = vshll.u32 %v2138, 8
          %v2179 = vmul.u32.u64.compose %v2178, %v2177
          %v2180 = vextract.low.u32 %v2179
          %v2181 = vextract.high.u32 %v2179
          %v2182 = vmul.u32.u64.compose %v2178, %v2173
          %v2183 = vextract.low.u32 %v2182
          %v2184 = vextract.high.u32 %v2182
          %v2185 = vmul.u32 %v2178, %v2169
          %v2186 = vadd.s32 %v2181, %v2183
          %vm2187 = vc.u32 %v2181, %v2183
          %v2188 = vadd.s32 %v2184, 1
          %v2189 = vsel %vm2187, %v2188, %v2184
          %v2190 = vadd.s32 %v2185, %v2189
          %v2191 = vadd.s32 %v2190, 536870912
          %v2192 = vshrl.u32 %v2191, 30
          %v2193 = vshll.u32 %v2192, 30
          %v2194 = vsub.s32 %v2190, %v2193
          %vm2195 = vcmp.lt.s32.totalorder %v2194, 0
          %v2196 = vsub.s32 0, %v2194
          %v2197 = vsel %vm2195, %v2196, %v2194
          %v2198 = vclz %v2197
          %v2199 = vsub.s32 %v2198, 2
          %vm2200 = vcmp.gt.s32.totalorder 0, %v2199
          %v2201 = vsel %vm2200, 0, %v2199
          %v2202 = vsub.s32 32, %v2201
          %v2203 = vshll.u32 %v2194, %v2201
          %v2204 = vshrl.u32 %v2186, %v2202
          %v2205 = vor.u32 %v2203, %v2204
          %v2206 = vsub.s32 4294967266, %v2201
          %v2207 = vadd.s32 %v2206, 127
          %v2208 = vshll.u32 %v2207, 23
          %v2209 = vor.u32 4788187, %v2208
          %v2210 = vand.u32 2147483647, %v2209
          %v2212 = vcvt.s32.f32 %v2205
          %v2213 = vmul.f32 %v2212, %v2210
          %v2214 = vxor.u32 %v2213, 2147483648
          %v2215 = vsel %vm2132, %v2214, %v2213
          %v2216 = vsub.s32 4, %v2192
          %v2217 = vsel %vm2132, %v2216, %v2192
          %v2218 = vsel %vm2131, %v584, %v2215
          %v2219 = vsel %vm2131, 0, %v2217
          %v2220 = vcosq.f32.pop %v2218
          %v2221 = vsinq.f32.pop %v2218
          %vm2222 = vweird.f32 %v584
          %v2223 = vand.u32 %v2219, 3
          %vm2224 = vcmp.lt.s32.totalorder %v2223, 2
          %vm2225 = vcmp.eq.s32.totalorder %v2223, 0
          %v2226 = vxor.u32 %v2221, 2147483648
          %v2227 = vsel %vm2225, %v2220, %v2226
          %vm2228 = vcmp.eq.s32.totalorder %v2223, 2
          %v2229 = vxor.u32 %v2220, 2147483648
          %v2230 = vsel %vm2228, %v2229, %v2221
          %v2231 = vsel %vm2224, %v2227, %v2230
          %v2232 = vsel %vm2222, nan, %v2231
          %v2233 = vmul.f32 %v687, 0.25
          %v2234 = vmul.f32 %v790, 0.25
          %v2235 = vmul.f32 %v893, 0.25
          %v2236 = vmul.f32 %v996, 0.25
          %v2237 = vmul.f32 %v1099, 0.25
          %v2238 = vmul.f32 %v1202, 0.25
          %v2239 = vmul.f32 %v1305, 0.25
          %v2240 = vmul.f32 %v1408, 0.25
          %v2241 = vmul.f32 %v1511, 0.25
          %v2242 = vmul.f32 %v1614, 0.25
          %v2243 = vmul.f32 %v1717, 0.25
          %v2244 = vmul.f32 %v1820, 0.25
          %v2245 = vmul.f32 %v1923, 0.25
          %v2246 = vmul.f32 %v2026, 0.25
          %v2247 = vmul.f32 %v2129, 0.25
          %v2248 = vmul.f32 %v2232, 0.25
          %v2249 = vpack.c.bf16 %v2234, %v2233
          %v2250 = vpack.c.bf16 %v2236, %v2235
          %v2251 = vpack.c.bf16 %v2238, %v2237
          %v2252 = vpack.c.bf16 %v2240, %v2239
          %v2253 = vpack.c.bf16 %v2242, %v2241
          %v2254 = vpack.c.bf16 %v2244, %v2243
          %v2255 = vpack.c.bf16 %v2246, %v2245
          %v2256 = vpack.c.bf16 %v2248, %v2247
          %v2265 = vunpack.c.l.b16 %v2249
          %v2266 = vunpack.c.h.b16 %v2249
          %v2267 = vunpack.c.l.b16 %v2250
          %v2268 = vunpack.c.h.b16 %v2250
          %v2269 = vunpack.c.l.b16 %v2251
          %v2270 = vunpack.c.h.b16 %v2251
          %v2271 = vunpack.c.l.b16 %v2252
          %v2272 = vunpack.c.h.b16 %v2252
          %v2273 = vunpack.c.l.b16 %v2253
          %v2274 = vunpack.c.h.b16 %v2253
          %v2275 = vunpack.c.l.b16 %v2254
          %v2276 = vunpack.c.h.b16 %v2254
          %v2277 = vunpack.c.l.b16 %v2255
          %v2278 = vunpack.c.h.b16 %v2255
          %v2279 = vunpack.c.l.b16 %v2256
          %v2280 = vunpack.c.h.b16 %v2256
          %v2281 = vpack.c.b16 %v2265, %v2265
          %v2282 = vpack.c.b16 %v2266, %v2266
          %v2283 = vpack.c.b16 %v2267, %v2267
          %v2284 = vpack.c.b16 %v2268, %v2268
          %v2285 = vpack.c.b16 %v2269, %v2269
          %v2286 = vpack.c.b16 %v2270, %v2270
          %v2287 = vpack.c.b16 %v2271, %v2271
          %v2288 = vpack.c.b16 %v2272, %v2272
          %v2289 = vpack.c.b16 %v2273, %v2273
          %v2290 = vpack.c.b16 %v2274, %v2274
          %v2291 = vpack.c.b16 %v2275, %v2275
          %v2292 = vpack.c.b16 %v2276, %v2276
          %v2293 = vpack.c.b16 %v2277, %v2277
          %v2294 = vpack.c.b16 %v2278, %v2278
          %v2295 = vpack.c.b16 %v2279, %v2279
          %v2296 = vpack.c.b16 %v2280, %v2280
          %2313 = vst [vmem:[%s244] sm:$0xf] %v2281
          %2314 = vst [vmem:[%s244 + $0x4] sm:$0xf] %v2282
          %2315 = vst [vmem:[%s244 + $0x8] sm:$0xf] %v2283
          %2316 = vst [vmem:[%s244 + $0xc] sm:$0xf] %v2284
          %2317 = vst [vmem:[%s244 + $0x10] sm:$0xf] %v2285
          %2318 = vst [vmem:[%s244 + $0x14] sm:$0xf] %v2286
          %2319 = vst [vmem:[%s244 + $0x18] sm:$0xf] %v2287
          %2320 = vst [vmem:[%s244 + $0x1c] sm:$0xf] %v2288
          %2321 = vst [vmem:[%s244 + $0x20] sm:$0xf] %v2289
          %2322 = vst [vmem:[%s244 + $0x24] sm:$0xf] %v2290
          %2323 = vst [vmem:[%s244 + $0x28] sm:$0xf] %v2291
          %2324 = vst [vmem:[%s244 + $0x2c] sm:$0xf] %v2292
          %2325 = vst [vmem:[%s244 + $0x30] sm:$0xf] %v2293
          %2326 = vst [vmem:[%s244 + $0x34] sm:$0xf] %v2294
          %2327 = vst [vmem:[%s244 + $0x38] sm:$0xf] %v2295
          %2328 = vst [vmem:[%s244 + $0x3c] sm:$0xf] %v2296
        $region48: #{tpu_custom_call.1} parent=31 // pred_fallthru
          _
        %s2329 = sand.u32 %s118, 1
        %s2330 = scalar_lea.sflag [#allocation5], %s2329
        %s2331 = sand.u32 %s118, 1
        %s2332 = smul.addr %s2331, 64
        %s2333 = scalar_lea.vmem [#allocation8], %s2332
        // Predicated region
        $region49: #{tpu_custom_call.1} parent=31 // pred_check
          %p2334 = pneg %p128
        $region50: #{tpu_custom_call.1} parent=31 // pred_check_branch
          %2336 = sbr.rel (%p2334) target = $region52
        $region51: #{tpu_custom_call.1} parent=31 // pred_region
          %s2337 = smul.u32 16, %s27
          %s2339 = ssub.s32 1024, 1024
          %2340 = vsyncadd %s2330, %s2339
          %s2341 = smul.addr %s2337, 64
          %s2342 = scalar_lea.hbm %s3, %s2341
          %s2343 = sshll.u32 %s2333, 4
          %s2344 = int_to_ptr.vmem [resolvable:$true] %s2343
          %2349 = dma.vmem_to_hbm [thread:$0]  %s2344, 1024, %s2342, %s2330, 64, 64, 4
        $region52: #{tpu_custom_call.1} parent=31 // pred_fallthru
          _
      $region32: #{tpu_custom_call.1} parent=5 // pred_fallthru
        _
      %p2350 = scmp.le.s32.totalorder 2, %s18
      // Predicated region
      $region53: #{tpu_custom_call.1} parent=5 // pred_check
        %p2351 = pneg %p2350
      $region54: #{tpu_custom_call.1} parent=5 // pred_check_branch
        %2353 = sbr.rel (%p2351) target = $region56
      $region55: #{tpu_custom_call.1} parent=5 // pred_region
        %s2354 = ssub.s32 %s18, 2
        // Predicated region
        $region57: #{tpu_custom_call.1} parent=55 // pred_check
          %p2355 = pneg %p134
        $region58: #{tpu_custom_call.1} parent=55 // pred_check_branch
          %2357 = sbr.rel (%p2355) target = $region60
        $region59: #{tpu_custom_call.1} parent=55 // pred_region
          %s2358 = sand.u32 %s119, 1
          %s2359 = scalar_lea.sflag [#allocation5], %s2358
          %s2360 = sand.u32 %s119, 1
          %s2361 = smul.addr %s2360, 64
          %s2362 = scalar_lea.vmem [#allocation8], %s2361
          %2363 = dma.done %s2359, 1024
        $region60: #{tpu_custom_call.1} parent=55 // pred_fallthru
          _
      $region56: #{tpu_custom_call.1} parent=5 // pred_fallthru
        _
    $region6: #{tpu_custom_call.1} parent=1 // loop_footer
      %s22 = sadd.s32 1, %s18
    $region7: #{tpu_custom_call.1} parent=1 // loop_footer_branch
      %17 = sbr.rel target = $region3
    $region8: #{tpu_custom_call.1} parent=1 // loop_exit
      _
    %2364 = vsyncpa [#allocation4], 1
    %s2365 = scalar_lea.sflag [#allocation4], 1
    %2366 = vsyncpa %s2365, 1
    %2367 = vsyncpa [#allocation7], 1
    %s2368 = scalar_lea.sflag [#allocation7], 1
    %2369 = vsyncpa %s2368, 1
    %2370 = vsyncpa [#allocation5], 1
    %s2371 = scalar_lea.sflag [#allocation5], 1
    %2372 = vsyncpa %s2371, 1

</llo_original>
